<compile_context>
chip_gen: v7x
topology: tpu7x:2x2x1
jax: 0.10.0
libtpu: 0.0.40
codegen_flags: <defaults>
</compile_context>

<pallas_src>
import jax
import jax.numpy as jnp
from jax.experimental import pallas as pl
from jax.experimental.pallas import tpu as pltpu


STRUCTURE = (128, 64, 128, 64, 128)
INPUT_SIZE = 3072
OUTPUT_SIZE = 10
LANE = 128          # padded width for all hidden layers and the output
MAX_TB = 256        # batch tile (multiple of MXU height on v6e/v7x)


def _round_up(x, m):
    return ((x + m - 1) // m) * m


def _mlp_kernel(x_ref, w0_ref, w1_ref, w2_ref, w3_ref, w4_ref, w5_ref, o_ref):
    # 6 MXU matmuls (bf16 inputs, f32 accumulation) + f32 ReLU between them.
    h = jnp.dot(x_ref[...], w0_ref[...], preferred_element_type=jnp.float32)
    h = jnp.maximum(h, 0.0).astype(jnp.bfloat16)
    h = jnp.dot(h, w1_ref[...], preferred_element_type=jnp.float32)
    h = jnp.maximum(h, 0.0).astype(jnp.bfloat16)
    h = jnp.dot(h, w2_ref[...], preferred_element_type=jnp.float32)
    h = jnp.maximum(h, 0.0).astype(jnp.bfloat16)
    h = jnp.dot(h, w3_ref[...], preferred_element_type=jnp.float32)
    h = jnp.maximum(h, 0.0).astype(jnp.bfloat16)
    h = jnp.dot(h, w4_ref[...], preferred_element_type=jnp.float32)
    h = jnp.maximum(h, 0.0).astype(jnp.bfloat16)
    # Last layer: lane-dense (TB, 128) f32 store; real logits are cols [0, 10).
    o_ref[...] = jnp.dot(h, w5_ref[...],
                         preferred_element_type=jnp.float32).astype(o_ref.dtype)


def _pad_weight_bf16(w):
    """Zero-pad both dims of an (in, out) weight up to multiples of 128, bf16."""
    fi, fo = w.shape
    pi, po = _round_up(fi, LANE), _round_up(fo, LANE)
    return jnp.pad(w, ((0, pi - fi), (0, po - fo))).astype(jnp.bfloat16)


def simplenet_den_cifar_forward(x, weights):
    """x: (B, 3, 32, 32) float32 (NCHW).  weights: list of (in, out) float32."""
    batch = x.shape[0]
    x_flat = x.reshape(batch, INPUT_SIZE).astype(jnp.bfloat16)

    # Batch tiling: TB multiple of 8 (sublane), padded batch multiple of TB.
    tb = min(MAX_TB, _round_up(batch, 8))
    b_pad = _round_up(batch, tb)
    if b_pad != batch:
        x_flat = jnp.pad(x_flat, ((0, b_pad - batch), (0, 0)))

    # Pad all weights to 128-multiples in both dims (exact; see header note).
    wp = [_pad_weight_bf16(w) for w in weights]

    grid = (b_pad // tb,)

    x_spec = pl.BlockSpec((tb, INPUT_SIZE), lambda i: (i, 0))
    # Constant block index -> weight tiles stay resident across grid steps.
    w_specs = [pl.BlockSpec(w.shape, lambda i: (0, 0)) for w in wp]
    out_spec = pl.BlockSpec((tb, LANE), lambda i: (i, 0))

    flops = 2 * b_pad * (INPUT_SIZE * LANE + 5 * LANE * LANE)
    bytes_accessed = (x_flat.size * 2                      # bf16 activations in
                      + sum(int(w.size) * 2 for w in wp)   # bf16 weights
                      + b_pad * LANE * 4)                  # f32 logits out
    cost = pl.CostEstimate(flops=flops, transcendentals=0,
                           bytes_accessed=bytes_accessed)

    out = pl.pallas_call(
        _mlp_kernel,
        out_shape=jax.ShapeDtypeStruct((b_pad, LANE), jnp.float32),
        grid=grid,
        in_specs=[x_spec] + w_specs,
        out_specs=out_spec,
        compiler_params=pltpu.CompilerParams(
            dimension_semantics=("parallel",),
            vmem_limit_bytes=32 << 20,
        ),
        cost_estimate=cost,
    )(x_flat, *wp)

    return out[:batch, :OUTPUT_SIZE]


def init_weights(key):
    """Weights stored as (in, out) so the kernel does x @ W (== torch x @ W.T)."""
    dims = (INPUT_SIZE,) + STRUCTURE + (OUTPUT_SIZE,)
    weights = []
    for i in range(len(dims) - 1):
        fan_in, fan_out = dims[i], dims[i + 1]
        key, sub = jax.random.split(key)
        bound = (1.0 / fan_in) ** 0.5
        w = jax.random.uniform(sub, (fan_in, fan_out), jnp.float32,
                               minval=-bound, maxval=bound)
        weights.append(w)
    return weights


def reference_forward(x, weights):
    """Plain JAX f32 reference (matches PyTorch semantics)."""
    h = x.reshape(x.shape[0], INPUT_SIZE)
    for i, w in enumerate(weights):
        h = h @ w
        if i != len(weights) - 1:
            h = jnp.maximum(h, 0.0)
    return h


if __name__ == "__main__":
    key = jax.random.PRNGKey(0)
    k_x, k_w = jax.random.split(key)

    # Small batch; channel/spatial shapes fixed by the module (3*32*32 = 3072).
    x = jax.random.normal(k_x, (2, 3, 32, 32), dtype=jnp.float32)
    weights = init_weights(k_w)

    out = simplenet_den_cifar_forward(x, weights)
    out = jax.block_until_ready(out)

    ref = reference_forward(x, weights)
    assert out.shape == (2, OUTPUT_SIZE), out.shape
    # bf16 inputs/weights with f32 accumulation -> loosened tolerance vs f32 ref.
    assert jnp.allclose(out, ref, atol=5e-2, rtol=5e-2), "mismatch vs reference"

    print("KERNEL_OK")
</pallas_src>

<mosaic_0001>
module attributes {stable_mosaic.version = 11 : i64} {
  func.func @_mlp_kernel(%arg0: i32, %arg1: memref<8x3072xbf16, #tpu.memory_space<vmem>>, %arg2: memref<3072x128xbf16, #tpu.memory_space<vmem>>, %arg3: memref<128x128xbf16, #tpu.memory_space<vmem>>, %arg4: memref<128x128xbf16, #tpu.memory_space<vmem>>, %arg5: memref<128x128xbf16, #tpu.memory_space<vmem>>, %arg6: memref<128x128xbf16, #tpu.memory_space<vmem>>, %arg7: memref<128x128xbf16, #tpu.memory_space<vmem>>, %arg8: memref<8x128xf32, #tpu.memory_space<vmem>>) attributes {dimension_semantics = [#tpu.dimension_semantics<parallel>], iteration_bounds = array<i64: 1>, scalar_prefetch = 0 : i64, scratch_operands = 0 : i64, tpu.core_type = #tpu.core_type<tc>, window_params = [{transform_indices = @transform_0, window_bounds = array<i64: 8, 3072>}, {pipeline_mode = #tpu.pipeline_mode<synchronous>, transform_indices = @transform_1, window_bounds = array<i64: 3072, 128>}, {pipeline_mode = #tpu.pipeline_mode<synchronous>, transform_indices = @transform_2, window_bounds = array<i64: 128, 128>}, {pipeline_mode = #tpu.pipeline_mode<synchronous>, transform_indices = @transform_3, window_bounds = array<i64: 128, 128>}, {pipeline_mode = #tpu.pipeline_mode<synchronous>, transform_indices = @transform_4, window_bounds = array<i64: 128, 128>}, {pipeline_mode = #tpu.pipeline_mode<synchronous>, transform_indices = @transform_5, window_bounds = array<i64: 128, 128>}, {pipeline_mode = #tpu.pipeline_mode<synchronous>, transform_indices = @transform_6, window_bounds = array<i64: 128, 128>}, {transform_indices = @transform_7, window_bounds = array<i64: 8, 128>}]} {
    %c0 = arith.constant 0 : index
    %c0_0 = arith.constant 0 : index
    %0 = vector.load %arg1[%c0, %c0_0] : memref<8x3072xbf16, #tpu.memory_space<vmem>>, vector<8x3072xbf16>
    %c0_1 = arith.constant 0 : index
    %c0_2 = arith.constant 0 : index
    %1 = vector.load %arg2[%c0_1, %c0_2] : memref<3072x128xbf16, #tpu.memory_space<vmem>>, vector<3072x128xbf16>
    %cst = arith.constant dense<0.000000e+00> : vector<8x128xf32>
    %2 = tpu.matmul %0, %1, %cst {dimension_numbers = #tpu.dot_dimension_numbers<[1], [0], [0], [1], [0, 0, 1, 1], [], []>} : vector<8x3072xbf16>, vector<3072x128xbf16>, vector<8x128xf32> -> vector<8x128xf32>
    %cst_3 = arith.constant 0.000000e+00 : f32
    %3 = vector.broadcast %cst_3 : f32 to vector<8x128xf32>
    %4 = arith.maximumf %2, %3 : vector<8x128xf32>
    %5 = arith.truncf %4 : vector<8x128xf32> to vector<8x128xbf16>
    %c0_4 = arith.constant 0 : index
    %c0_5 = arith.constant 0 : index
    %6 = vector.load %arg3[%c0_4, %c0_5] : memref<128x128xbf16, #tpu.memory_space<vmem>>, vector<128x128xbf16>
    %cst_6 = arith.constant dense<0.000000e+00> : vector<8x128xf32>
    %7 = tpu.matmul %5, %6, %cst_6 {dimension_numbers = #tpu.dot_dimension_numbers<[1], [0], [0], [1], [0, 0, 1, 1], [], []>} : vector<8x128xbf16>, vector<128x128xbf16>, vector<8x128xf32> -> vector<8x128xf32>
    %cst_7 = arith.constant 0.000000e+00 : f32
    %8 = vector.broadcast %cst_7 : f32 to vector<8x128xf32>
    %9 = arith.maximumf %7, %8 : vector<8x128xf32>
    %10 = arith.truncf %9 : vector<8x128xf32> to vector<8x128xbf16>
    %c0_8 = arith.constant 0 : index
    %c0_9 = arith.constant 0 : index
    %11 = vector.load %arg4[%c0_8, %c0_9] : memref<128x128xbf16, #tpu.memory_space<vmem>>, vector<128x128xbf16>
    %cst_10 = arith.constant dense<0.000000e+00> : vector<8x128xf32>
    %12 = tpu.matmul %10, %11, %cst_10 {dimension_numbers = #tpu.dot_dimension_numbers<[1], [0], [0], [1], [0, 0, 1, 1], [], []>} : vector<8x128xbf16>, vector<128x128xbf16>, vector<8x128xf32> -> vector<8x128xf32>
    %cst_11 = arith.constant 0.000000e+00 : f32
    %13 = vector.broadcast %cst_11 : f32 to vector<8x128xf32>
    %14 = arith.maximumf %12, %13 : vector<8x128xf32>
    %15 = arith.truncf %14 : vector<8x128xf32> to vector<8x128xbf16>
    %c0_12 = arith.constant 0 : index
    %c0_13 = arith.constant 0 : index
    %16 = vector.load %arg5[%c0_12, %c0_13] : memref<128x128xbf16, #tpu.memory_space<vmem>>, vector<128x128xbf16>
    %cst_14 = arith.constant dense<0.000000e+00> : vector<8x128xf32>
    %17 = tpu.matmul %15, %16, %cst_14 {dimension_numbers = #tpu.dot_dimension_numbers<[1], [0], [0], [1], [0, 0, 1, 1], [], []>} : vector<8x128xbf16>, vector<128x128xbf16>, vector<8x128xf32> -> vector<8x128xf32>
    %cst_15 = arith.constant 0.000000e+00 : f32
    %18 = vector.broadcast %cst_15 : f32 to vector<8x128xf32>
    %19 = arith.maximumf %17, %18 : vector<8x128xf32>
    %20 = arith.truncf %19 : vector<8x128xf32> to vector<8x128xbf16>
    %c0_16 = arith.constant 0 : index
    %c0_17 = arith.constant 0 : index
    %21 = vector.load %arg6[%c0_16, %c0_17] : memref<128x128xbf16, #tpu.memory_space<vmem>>, vector<128x128xbf16>
    %cst_18 = arith.constant dense<0.000000e+00> : vector<8x128xf32>
    %22 = tpu.matmul %20, %21, %cst_18 {dimension_numbers = #tpu.dot_dimension_numbers<[1], [0], [0], [1], [0, 0, 1, 1], [], []>} : vector<8x128xbf16>, vector<128x128xbf16>, vector<8x128xf32> -> vector<8x128xf32>
    %cst_19 = arith.constant 0.000000e+00 : f32
    %23 = vector.broadcast %cst_19 : f32 to vector<8x128xf32>
    %24 = arith.maximumf %22, %23 : vector<8x128xf32>
    %25 = arith.truncf %24 : vector<8x128xf32> to vector<8x128xbf16>
    %c0_20 = arith.constant 0 : index
    %c0_21 = arith.constant 0 : index
    %26 = vector.load %arg7[%c0_20, %c0_21] : memref<128x128xbf16, #tpu.memory_space<vmem>>, vector<128x128xbf16>
    %cst_22 = arith.constant dense<0.000000e+00> : vector<8x128xf32>
    %27 = tpu.matmul %25, %26, %cst_22 {dimension_numbers = #tpu.dot_dimension_numbers<[1], [0], [0], [1], [0, 0, 1, 1], [], []>} : vector<8x128xbf16>, vector<128x128xbf16>, vector<8x128xf32> -> vector<8x128xf32>
    %c0_23 = arith.constant 0 : index
    %c0_24 = arith.constant 0 : index
    %28 = vector.load %arg8[%c0_23, %c0_24] : memref<8x128xf32, #tpu.memory_space<vmem>>, vector<8x128xf32>
    tpu.vector_store %arg8[%c0_23, %c0_24], %27 {strides = array<i32>} : memref<8x128xf32, #tpu.memory_space<vmem>>, vector<8x128xf32>,
    return
  }
  func.func @transform_0(%arg0: i32) -> (i32, i32) {
    %c0_i32 = arith.constant 0 : i32
    %c0_i32_0 = arith.constant 0 : i32
    return %arg0, %c0_i32 : i32, i32
  }
  func.func @transform_1(%arg0: i32) -> (i32, i32) {
    %c0_i32 = arith.constant 0 : i32
    %c0_i32_0 = arith.constant 0 : i32
    %c0_i32_1 = arith.constant 0 : i32
    return %c0_i32, %c0_i32_0 : i32, i32
  }
  func.func @transform_2(%arg0: i32) -> (i32, i32) {
    %c0_i32 = arith.constant 0 : i32
    %c0_i32_0 = arith.constant 0 : i32
    %c0_i32_1 = arith.constant 0 : i32
    return %c0_i32, %c0_i32_0 : i32, i32
  }
  func.func @transform_3(%arg0: i32) -> (i32, i32) {
    %c0_i32 = arith.constant 0 : i32
    %c0_i32_0 = arith.constant 0 : i32
    %c0_i32_1 = arith.constant 0 : i32
    return %c0_i32, %c0_i32_0 : i32, i32
  }
  func.func @transform_4(%arg0: i32) -> (i32, i32) {
    %c0_i32 = arith.constant 0 : i32
    %c0_i32_0 = arith.constant 0 : i32
    %c0_i32_1 = arith.constant 0 : i32
    return %c0_i32, %c0_i32_0 : i32, i32
  }
  func.func @transform_5(%arg0: i32) -> (i32, i32) {
    %c0_i32 = arith.constant 0 : i32
    %c0_i32_0 = arith.constant 0 : i32
    %c0_i32_1 = arith.constant 0 : i32
    return %c0_i32, %c0_i32_0 : i32, i32
  }
  func.func @transform_6(%arg0: i32) -> (i32, i32) {
    %c0_i32 = arith.constant 0 : i32
    %c0_i32_0 = arith.constant 0 : i32
    %c0_i32_1 = arith.constant 0 : i32
    return %c0_i32, %c0_i32_0 : i32, i32
  }
  func.func @transform_7(%arg0: i32) -> (i32, i32) {
    %c0_i32 = arith.constant 0 : i32
    %c0_i32_0 = arith.constant 0 : i32
    return %arg0, %c0_i32 : i32, i32
  }
}

</mosaic_0001>

<llo_original>
// kernel: tpu_custom_call.1
$region0: #{tpu_custom_call.1}
  #allocation0 [shape = 'u32[]', space=smem, size = 0x4, offset = 0x4, fixed_abs, tag = 'smem constant byte address 0x4 - core index']
  #allocation1 [shape = 'u32[144,128]{1,0:T(1,128)}', space=vmem, size = 0x12000, scoped, tag = 'internal scratch']
  %s0 = inlined_call_operand.hbm [shape: bf16[8,3072], index: 0, kind: input, shape index: {}]
  %s1 = inlined_call_operand.hbm [shape: bf16[3072,128], index: 1, kind: input, shape index: {}]
  %s2 = inlined_call_operand.hbm [shape: bf16[128,128], index: 2, kind: input, shape index: {}]
  %s3 = inlined_call_operand.hbm [shape: bf16[128,128], index: 3, kind: input, shape index: {}]
  %s4 = inlined_call_operand.hbm [shape: bf16[128,128], index: 4, kind: input, shape index: {}]
  %s5 = inlined_call_operand.hbm [shape: bf16[128,128], index: 5, kind: input, shape index: {}]
  %s6 = inlined_call_operand.hbm [shape: bf16[128,128], index: 6, kind: input, shape index: {}]
  %s7 = inlined_call_operand.hbm [shape: f32[8,128], index: 7, kind: output, shape index: {}]
  %s8 = sld [smem:[#allocation0]]
  $region66: #{tpu_custom_call.1} parent=0
    _
  %s10 = ssub.s32 1, %s8
  %s11 = scalar_select 0, %s10, %s8
  $region1: #{tpu_custom_call.1} parent=0
    #allocation2 [shape = 'u8[49152]{0}', space=vmem, size = 0xc000, scoped, tag = 'input window, operand 0, single buffered']
    #allocation3 [shape = 's32[1]{0}', space=sflag, size = 0x4, scoped, tag = 'scoped memory for tpu_custom_call.1']
    #allocation4 [shape = 's32[1]{0}', space=sflag, size = 0x4, scoped, tag = 'scoped memory for tpu_custom_call.1']
    #allocation5 [shape = 'u8[786432]{0}', space=vmem, size = 0xc0000, scoped, tag = 'input window, operand 1, single buffered']
    #allocation6 [shape = 's32[1]{0}', space=sflag, size = 0x4, scoped, tag = 'scoped memory for tpu_custom_call.1']
    #allocation7 [shape = 'u8[32768]{0}', space=vmem, size = 0x8000, scoped, tag = 'input window, operand 2, single buffered']
    #allocation8 [shape = 'u8[32768]{0}', space=vmem, size = 0x8000, scoped, tag = 'input window, operand 3, single buffered']
    #allocation9 [shape = 's32[1]{0}', space=sflag, size = 0x4, scoped, tag = 'scoped memory for tpu_custom_call.1']
    #allocation10 [shape = 'u8[32768]{0}', space=vmem, size = 0x8000, scoped, tag = 'input window, operand 4, single buffered']
    #allocation11 [shape = 'u8[32768]{0}', space=vmem, size = 0x8000, scoped, tag = 'input window, operand 5, single buffered']
    #allocation12 [shape = 's32[1]{0}', space=sflag, size = 0x4, scoped, tag = 'scoped memory for tpu_custom_call.1']
    #allocation13 [shape = 'u8[32768]{0}', space=vmem, size = 0x8000, scoped, tag = 'input window, operand 6, single buffered']
    #allocation14 [shape = 'u8[4096]{0}', space=vmem, size = 0x1000, scoped, tag = 'output window, operand 0, single buffered']
    %12 = vsyncpa [#allocation3], 0
    %13 = vsyncpa [#allocation6], 0
    %14 = vsyncpa [#allocation9], 0
    %15 = vsyncpa [#allocation12], 0
    %16 = vsyncpa [#allocation4], 0
    // Predicated region
    $region2: #{tpu_custom_call.1} parent=1 // pred_check
      _
    $region3: #{tpu_custom_call.1} parent=1 // pred_check_branch
      %18 = sbr.rel (0) target = $region5
    $region4: #{tpu_custom_call.1} parent=1 // pred_region
      %s20 = ssub.s32 1536, 1536
      %21 = vsyncadd [#allocation3], %s20
      %s23 = sshll.u32 [#allocation2], 4
      %s24 = int_to_ptr.vmem [resolvable:$true] %s23
      %26 = dma.hbm_to_vmem [thread:$0]  %s0, 1536, %s24, [#allocation3]
    $region5: #{tpu_custom_call.1} parent=1 // pred_fallthru
      _
    // Predicated region
    $region6: #{tpu_custom_call.1} parent=1 // pred_check
      _
    $region7: #{tpu_custom_call.1} parent=1 // pred_check_branch
      %28 = sbr.rel (0) target = $region9
    $region8: #{tpu_custom_call.1} parent=1 // pred_region
      %s30 = ssub.s32 24576, 24576
      %31 = vsyncadd [#allocation6], %s30
      %s32 = sshll.u32 [#allocation5], 4
      %s33 = int_to_ptr.vmem [resolvable:$true] %s32
      %38 = dma.hbm_to_vmem [thread:$0]  %s1, 24576, %s33, [#allocation6], 64, 64, 4
    $region9: #{tpu_custom_call.1} parent=1 // pred_fallthru
      _
    // Predicated region
    $region10: #{tpu_custom_call.1} parent=1 // pred_check
      _
    $region11: #{tpu_custom_call.1} parent=1 // pred_check_branch
      %40 = sbr.rel (0) target = $region13
    $region12: #{tpu_custom_call.1} parent=1 // pred_region
      %s42 = ssub.s32 1024, 1024
      %43 = vsyncadd [#allocation6], %s42
      %s44 = sshll.u32 [#allocation7], 4
      %s45 = int_to_ptr.vmem [resolvable:$true] %s44
      %50 = dma.hbm_to_vmem [thread:$0]  %s2, 1024, %s45, [#allocation6], 64, 64, 4
    $region13: #{tpu_custom_call.1} parent=1 // pred_fallthru
      _
    // Predicated region
    $region14: #{tpu_custom_call.1} parent=1 // pred_check
      _
    $region15: #{tpu_custom_call.1} parent=1 // pred_check_branch
      %52 = sbr.rel (0) target = $region17
    $region16: #{tpu_custom_call.1} parent=1 // pred_region
      %s54 = ssub.s32 1024, 1024
      %55 = vsyncadd [#allocation9], %s54
      %s56 = sshll.u32 [#allocation8], 4
      %s57 = int_to_ptr.vmem [resolvable:$true] %s56
      %62 = dma.hbm_to_vmem [thread:$0]  %s3, 1024, %s57, [#allocation9], 64, 64, 4
    $region17: #{tpu_custom_call.1} parent=1 // pred_fallthru
      _
    // Predicated region
    $region18: #{tpu_custom_call.1} parent=1 // pred_check
      _
    $region19: #{tpu_custom_call.1} parent=1 // pred_check_branch
      %64 = sbr.rel (0) target = $region21
    $region20: #{tpu_custom_call.1} parent=1 // pred_region
      %s66 = ssub.s32 1024, 1024
      %67 = vsyncadd [#allocation9], %s66
      %s68 = sshll.u32 [#allocation10], 4
      %s69 = int_to_ptr.vmem [resolvable:$true] %s68
      %74 = dma.hbm_to_vmem [thread:$0]  %s4, 1024, %s69, [#allocation9], 64, 64, 4
    $region21: #{tpu_custom_call.1} parent=1 // pred_fallthru
      _
    // Predicated region
    $region22: #{tpu_custom_call.1} parent=1 // pred_check
      _
    $region23: #{tpu_custom_call.1} parent=1 // pred_check_branch
      %76 = sbr.rel (0) target = $region25
    $region24: #{tpu_custom_call.1} parent=1 // pred_region
      %s78 = ssub.s32 1024, 1024
      %79 = vsyncadd [#allocation12], %s78
      %s80 = sshll.u32 [#allocation11], 4
      %s81 = int_to_ptr.vmem [resolvable:$true] %s80
      %86 = dma.hbm_to_vmem [thread:$0]  %s5, 1024, %s81, [#allocation12], 64, 64, 4
    $region25: #{tpu_custom_call.1} parent=1 // pred_fallthru
      _
    // Predicated region
    $region26: #{tpu_custom_call.1} parent=1 // pred_check
      _
    $region27: #{tpu_custom_call.1} parent=1 // pred_check_branch
      %88 = sbr.rel (0) target = $region29
    $region28: #{tpu_custom_call.1} parent=1 // pred_region
      %s90 = ssub.s32 1024, 1024
      %91 = vsyncadd [#allocation12], %s90
      %s92 = sshll.u32 [#allocation13], 4
      %s93 = int_to_ptr.vmem [resolvable:$true] %s92
      %98 = dma.hbm_to_vmem [thread:$0]  %s6, 1024, %s93, [#allocation12], 64, 64, 4
    $region29: #{tpu_custom_call.1} parent=1 // pred_fallthru
      _
    // Predicated region
    $region30: #{tpu_custom_call.1} parent=1 // pred_check
      _
    $region31: #{tpu_custom_call.1} parent=1 // pred_check_branch
      %100 = sbr.rel (0) target = $region33
    $region32: #{tpu_custom_call.1} parent=1 // pred_region
      %101 = dma.done [#allocation3], 1536
    $region33: #{tpu_custom_call.1} parent=1 // pred_fallthru
      _
    // Predicated region
    $region34: #{tpu_custom_call.1} parent=1 // pred_check
      _
    $region35: #{tpu_custom_call.1} parent=1 // pred_check_branch
      %103 = sbr.rel (0) target = $region37
    $region36: #{tpu_custom_call.1} parent=1 // pred_region
      %104 = dma.done [#allocation6], 24576
    $region37: #{tpu_custom_call.1} parent=1 // pred_fallthru
      _
    // Predicated region
    $region38: #{tpu_custom_call.1} parent=1 // pred_check
      _
    $region39: #{tpu_custom_call.1} parent=1 // pred_check_branch
      %106 = sbr.rel (0) target = $region41
    $region40: #{tpu_custom_call.1} parent=1 // pred_region
      %107 = dma.done [#allocation6], 1024
    $region41: #{tpu_custom_call.1} parent=1 // pred_fallthru
      _
    // Predicated region
    $region42: #{tpu_custom_call.1} parent=1 // pred_check
      _
    $region43: #{tpu_custom_call.1} parent=1 // pred_check_branch
      %109 = sbr.rel (0) target = $region45
    $region44: #{tpu_custom_call.1} parent=1 // pred_region
      %110 = dma.done [#allocation9], 1024
    $region45: #{tpu_custom_call.1} parent=1 // pred_fallthru
      _
    // Predicated region
    $region46: #{tpu_custom_call.1} parent=1 // pred_check
      _
    $region47: #{tpu_custom_call.1} parent=1 // pred_check_branch
      %112 = sbr.rel (0) target = $region49
    $region48: #{tpu_custom_call.1} parent=1 // pred_region
      %113 = dma.done [#allocation9], 1024
    $region49: #{tpu_custom_call.1} parent=1 // pred_fallthru
      _
    // Predicated region
    $region50: #{tpu_custom_call.1} parent=1 // pred_check
      _
    $region51: #{tpu_custom_call.1} parent=1 // pred_check_branch
      %115 = sbr.rel (0) target = $region53
    $region52: #{tpu_custom_call.1} parent=1 // pred_region
      %116 = dma.done [#allocation12], 1024
    $region53: #{tpu_custom_call.1} parent=1 // pred_fallthru
      _
    // Predicated region
    $region54: #{tpu_custom_call.1} parent=1 // pred_check
      _
    $region55: #{tpu_custom_call.1} parent=1 // pred_check_branch
      %118 = sbr.rel (0) target = $region57
    $region56: #{tpu_custom_call.1} parent=1 // pred_region
      %119 = dma.done [#allocation12], 1024
    $region57: #{tpu_custom_call.1} parent=1 // pred_fallthru
      _
    %v121 = vld [vmem:[#allocation2] sm:$0xff]
    %v122 = vld [vmem:[#allocation2 + $0x8] sm:$0xff]
    %v123 = vld [vmem:[#allocation2 + $0x10] sm:$0xff]
    %v124 = vld [vmem:[#allocation2 + $0x18] sm:$0xff]
    %v125 = vld [vmem:[#allocation2 + $0x20] sm:$0xff]
    %v126 = vld [vmem:[#allocation2 + $0x28] sm:$0xff]
    %v127 = vld [vmem:[#allocation2 + $0x30] sm:$0xff]
    %v128 = vld [vmem:[#allocation2 + $0x38] sm:$0xff]
    %v129 = vld [vmem:[#allocation2 + $0x40] sm:$0xff]
    %v130 = vld [vmem:[#allocation2 + $0x48] sm:$0xff]
    %v131 = vld [vmem:[#allocation2 + $0x50] sm:$0xff]
    %v132 = vld [vmem:[#allocation2 + $0x58] sm:$0xff]
    %v133 = vld [vmem:[#allocation5] sm:$0xf]
    %v134 = vld [vmem:[#allocation5 + $0x4] sm:$0xf]
    %v135 = vld [vmem:[#allocation5 + $0x8] sm:$0xf]
    %v136 = vld [vmem:[#allocation5 + $0xc] sm:$0xf]
    %v137 = vld [vmem:[#allocation5 + $0x10] sm:$0xf]
    %v138 = vld [vmem:[#allocation5 + $0x14] sm:$0xf]
    %v139 = vld [vmem:[#allocation5 + $0x18] sm:$0xf]
    %v140 = vld [vmem:[#allocation5 + $0x1c] sm:$0xf]
    %v141 = vld [vmem:[#allocation5 + $0x20] sm:$0xf]
    %v142 = vld [vmem:[#allocation5 + $0x24] sm:$0xf]
    %v143 = vld [vmem:[#allocation5 + $0x28] sm:$0xf]
    %v144 = vld [vmem:[#allocation5 + $0x2c] sm:$0xf]
    %v145 = vld [vmem:[#allocation5 + $0x30] sm:$0xf]
    %v146 = vld [vmem:[#allocation5 + $0x34] sm:$0xf]
    %v147 = vld [vmem:[#allocation5 + $0x38] sm:$0xf]
    %v148 = vld [vmem:[#allocation5 + $0x3c] sm:$0xf]
    %v149 = vld [vmem:[#allocation5 + $0x40] sm:$0xf]
    %v150 = vld [vmem:[#allocation5 + $0x44] sm:$0xf]
    %v151 = vld [vmem:[#allocation5 + $0x48] sm:$0xf]
    %v152 = vld [vmem:[#allocation5 + $0x4c] sm:$0xf]
    %v153 = vld [vmem:[#allocation5 + $0x50] sm:$0xf]
    %v154 = vld [vmem:[#allocation5 + $0x54] sm:$0xf]
    %v155 = vld [vmem:[#allocation5 + $0x58] sm:$0xf]
    %v156 = vld [vmem:[#allocation5 + $0x5c] sm:$0xf]
    %v157 = vld [vmem:[#allocation5 + $0x60] sm:$0xf]
    %v158 = vld [vmem:[#allocation5 + $0x64] sm:$0xf]
    %v159 = vld [vmem:[#allocation5 + $0x68] sm:$0xf]
    %v160 = vld [vmem:[#allocation5 + $0x6c] sm:$0xf]
    %v161 = vld [vmem:[#allocation5 + $0x70] sm:$0xf]
    %v162 = vld [vmem:[#allocation5 + $0x74] sm:$0xf]
    %v163 = vld [vmem:[#allocation5 + $0x78] sm:$0xf]
    %v164 = vld [vmem:[#allocation5 + $0x7c] sm:$0xf]
    %v165 = vld [vmem:[#allocation5 + $0x80] sm:$0xf]
    %v166 = vld [vmem:[#allocation5 + $0x84] sm:$0xf]
    %v167 = vld [vmem:[#allocation5 + $0x88] sm:$0xf]
    %v168 = vld [vmem:[#allocation5 + $0x8c] sm:$0xf]
    %v169 = vld [vmem:[#allocation5 + $0x90] sm:$0xf]
    %v170 = vld [vmem:[#allocation5 + $0x94] sm:$0xf]
    %v171 = vld [vmem:[#allocation5 + $0x98] sm:$0xf]
    %v172 = vld [vmem:[#allocation5 + $0x9c] sm:$0xf]
    %v173 = vld [vmem:[#allocation5 + $0xa0] sm:$0xf]
    %v174 = vld [vmem:[#allocation5 + $0xa4] sm:$0xf]
    %v175 = vld [vmem:[#allocation5 + $0xa8] sm:$0xf]
    %v176 = vld [vmem:[#allocation5 + $0xac] sm:$0xf]
    %v177 = vld [vmem:[#allocation5 + $0xb0] sm:$0xf]
    %v178 = vld [vmem:[#allocation5 + $0xb4] sm:$0xf]
    %v179 = vld [vmem:[#allocation5 + $0xb8] sm:$0xf]
    %v180 = vld [vmem:[#allocation5 + $0xbc] sm:$0xf]
    %v181 = vld [vmem:[#allocation5 + $0xc0] sm:$0xf]
    %v182 = vld [vmem:[#allocation5 + $0xc4] sm:$0xf]
    %v183 = vld [vmem:[#allocation5 + $0xc8] sm:$0xf]
    %v184 = vld [vmem:[#allocation5 + $0xcc] sm:$0xf]
    %v185 = vld [vmem:[#allocation5 + $0xd0] sm:$0xf]
    %v186 = vld [vmem:[#allocation5 + $0xd4] sm:$0xf]
    %v187 = vld [vmem:[#allocation5 + $0xd8] sm:$0xf]
    %v188 = vld [vmem:[#allocation5 + $0xdc] sm:$0xf]
    %v189 = vld [vmem:[#allocation5 + $0xe0] sm:$0xf]
    %v190 = vld [vmem:[#allocation5 + $0xe4] sm:$0xf]
    %v191 = vld [vmem:[#allocation5 + $0xe8] sm:$0xf]
    %v192 = vld [vmem:[#allocation5 + $0xec] sm:$0xf]
    %v193 = vld [vmem:[#allocation5 + $0xf0] sm:$0xf]
    %v194 = vld [vmem:[#allocation5 + $0xf4] sm:$0xf]
    %v195 = vld [vmem:[#allocation5 + $0xf8] sm:$0xf]
    %v196 = vld [vmem:[#allocation5 + $0xfc] sm:$0xf]
    %v197 = vld [vmem:[#allocation5 + $0x100] sm:$0xf]
    %v198 = vld [vmem:[#allocation5 + $0x104] sm:$0xf]
    %v199 = vld [vmem:[#allocation5 + $0x108] sm:$0xf]
    %v200 = vld [vmem:[#allocation5 + $0x10c] sm:$0xf]
    %v201 = vld [vmem:[#allocation5 + $0x110] sm:$0xf]
    %v202 = vld [vmem:[#allocation5 + $0x114] sm:$0xf]
    %v203 = vld [vmem:[#allocation5 + $0x118] sm:$0xf]
    %v204 = vld [vmem:[#allocation5 + $0x11c] sm:$0xf]
    %v205 = vld [vmem:[#allocation5 + $0x120] sm:$0xf]
    %v206 = vld [vmem:[#allocation5 + $0x124] sm:$0xf]
    %v207 = vld [vmem:[#allocation5 + $0x128] sm:$0xf]
    %v208 = vld [vmem:[#allocation5 + $0x12c] sm:$0xf]
    %v209 = vld [vmem:[#allocation5 + $0x130] sm:$0xf]
    %v210 = vld [vmem:[#allocation5 + $0x134] sm:$0xf]
    %v211 = vld [vmem:[#allocation5 + $0x138] sm:$0xf]
    %v212 = vld [vmem:[#allocation5 + $0x13c] sm:$0xf]
    %v213 = vld [vmem:[#allocation5 + $0x140] sm:$0xf]
    %v214 = vld [vmem:[#allocation5 + $0x144] sm:$0xf]
    %v215 = vld [vmem:[#allocation5 + $0x148] sm:$0xf]
    %v216 = vld [vmem:[#allocation5 + $0x14c] sm:$0xf]
    %v217 = vld [vmem:[#allocation5 + $0x150] sm:$0xf]
    %v218 = vld [vmem:[#allocation5 + $0x154] sm:$0xf]
    %v219 = vld [vmem:[#allocation5 + $0x158] sm:$0xf]
    %v220 = vld [vmem:[#allocation5 + $0x15c] sm:$0xf]
    %v221 = vld [vmem:[#allocation5 + $0x160] sm:$0xf]
    %v222 = vld [vmem:[#allocation5 + $0x164] sm:$0xf]
    %v223 = vld [vmem:[#allocation5 + $0x168] sm:$0xf]
    %v224 = vld [vmem:[#allocation5 + $0x16c] sm:$0xf]
    %v225 = vld [vmem:[#allocation5 + $0x170] sm:$0xf]
    %v226 = vld [vmem:[#allocation5 + $0x174] sm:$0xf]
    %v227 = vld [vmem:[#allocation5 + $0x178] sm:$0xf]
    %v228 = vld [vmem:[#allocation5 + $0x17c] sm:$0xf]
    %v229 = vld [vmem:[#allocation5 + $0x180] sm:$0xf]
    %v230 = vld [vmem:[#allocation5 + $0x184] sm:$0xf]
    %v231 = vld [vmem:[#allocation5 + $0x188] sm:$0xf]
    %v232 = vld [vmem:[#allocation5 + $0x18c] sm:$0xf]
    %v233 = vld [vmem:[#allocation5 + $0x190] sm:$0xf]
    %v234 = vld [vmem:[#allocation5 + $0x194] sm:$0xf]
    %v235 = vld [vmem:[#allocation5 + $0x198] sm:$0xf]
    %v236 = vld [vmem:[#allocation5 + $0x19c] sm:$0xf]
    %v237 = vld [vmem:[#allocation5 + $0x1a0] sm:$0xf]
    %v238 = vld [vmem:[#allocation5 + $0x1a4] sm:$0xf]
    %v239 = vld [vmem:[#allocation5 + $0x1a8] sm:$0xf]
    %v240 = vld [vmem:[#allocation5 + $0x1ac] sm:$0xf]
    %v241 = vld [vmem:[#allocation5 + $0x1b0] sm:$0xf]
    %v242 = vld [vmem:[#allocation5 + $0x1b4] sm:$0xf]
    %v243 = vld [vmem:[#allocation5 + $0x1b8] sm:$0xf]
    %v244 = vld [vmem:[#allocation5 + $0x1bc] sm:$0xf]
    %v245 = vld [vmem:[#allocation5 + $0x1c0] sm:$0xf]
    %v246 = vld [vmem:[#allocation5 + $0x1c4] sm:$0xf]
    %v247 = vld [vmem:[#allocation5 + $0x1c8] sm:$0xf]
    %v248 = vld [vmem:[#allocation5 + $0x1cc] sm:$0xf]
    %v249 = vld [vmem:[#allocation5 + $0x1d0] sm:$0xf]
    %v250 = vld [vmem:[#allocation5 + $0x1d4] sm:$0xf]
    %v251 = vld [vmem:[#allocation5 + $0x1d8] sm:$0xf]
    %v252 = vld [vmem:[#allocation5 + $0x1dc] sm:$0xf]
    %v253 = vld [vmem:[#allocation5 + $0x1e0] sm:$0xf]
    %v254 = vld [vmem:[#allocation5 + $0x1e4] sm:$0xf]
    %v255 = vld [vmem:[#allocation5 + $0x1e8] sm:$0xf]
    %v256 = vld [vmem:[#allocation5 + $0x1ec] sm:$0xf]
    %v257 = vld [vmem:[#allocation5 + $0x1f0] sm:$0xf]
    %v258 = vld [vmem:[#allocation5 + $0x1f4] sm:$0xf]
    %v259 = vld [vmem:[#allocation5 + $0x1f8] sm:$0xf]
    %v260 = vld [vmem:[#allocation5 + $0x1fc] sm:$0xf]
    %v261 = vld [vmem:[#allocation5 + $0x200] sm:$0xf]
    %v262 = vld [vmem:[#allocation5 + $0x204] sm:$0xf]
    %v263 = vld [vmem:[#allocation5 + $0x208] sm:$0xf]
    %v264 = vld [vmem:[#allocation5 + $0x20c] sm:$0xf]
    %v265 = vld [vmem:[#allocation5 + $0x210] sm:$0xf]
    %v266 = vld [vmem:[#allocation5 + $0x214] sm:$0xf]
    %v267 = vld [vmem:[#allocation5 + $0x218] sm:$0xf]
    %v268 = vld [vmem:[#allocation5 + $0x21c] sm:$0xf]
    %v269 = vld [vmem:[#allocation5 + $0x220] sm:$0xf]
    %v270 = vld [vmem:[#allocation5 + $0x224] sm:$0xf]
    %v271 = vld [vmem:[#allocation5 + $0x228] sm:$0xf]
    %v272 = vld [vmem:[#allocation5 + $0x22c] sm:$0xf]
    %v273 = vld [vmem:[#allocation5 + $0x230] sm:$0xf]
    %v274 = vld [vmem:[#allocation5 + $0x234] sm:$0xf]
    %v275 = vld [vmem:[#allocation5 + $0x238] sm:$0xf]
    %v276 = vld [vmem:[#allocation5 + $0x23c] sm:$0xf]
    %v277 = vld [vmem:[#allocation5 + $0x240] sm:$0xf]
    %v278 = vld [vmem:[#allocation5 + $0x244] sm:$0xf]
    %v279 = vld [vmem:[#allocation5 + $0x248] sm:$0xf]
    %v280 = vld [vmem:[#allocation5 + $0x24c] sm:$0xf]
    %v281 = vld [vmem:[#allocation5 + $0x250] sm:$0xf]
    %v282 = vld [vmem:[#allocation5 + $0x254] sm:$0xf]
    %v283 = vld [vmem:[#allocation5 + $0x258] sm:$0xf]
    %v284 = vld [vmem:[#allocation5 + $0x25c] sm:$0xf]
    %v285 = vld [vmem:[#allocation5 + $0x260] sm:$0xf]
    %v286 = vld [vmem:[#allocation5 + $0x264] sm:$0xf]
    %v287 = vld [vmem:[#allocation5 + $0x268] sm:$0xf]
    %v288 = vld [vmem:[#allocation5 + $0x26c] sm:$0xf]
    %v289 = vld [vmem:[#allocation5 + $0x270] sm:$0xf]
    %v290 = vld [vmem:[#allocation5 + $0x274] sm:$0xf]
    %v291 = vld [vmem:[#allocation5 + $0x278] sm:$0xf]
    %v292 = vld [vmem:[#allocation5 + $0x27c] sm:$0xf]
    %v293 = vld [vmem:[#allocation5 + $0x280] sm:$0xf]
    %v294 = vld [vmem:[#allocation5 + $0x284] sm:$0xf]
    %v295 = vld [vmem:[#allocation5 + $0x288] sm:$0xf]
    %v296 = vld [vmem:[#allocation5 + $0x28c] sm:$0xf]
    %v297 = vld [vmem:[#allocation5 + $0x290] sm:$0xf]
    %v298 = vld [vmem:[#allocation5 + $0x294] sm:$0xf]
    %v299 = vld [vmem:[#allocation5 + $0x298] sm:$0xf]
    %v300 = vld [vmem:[#allocation5 + $0x29c] sm:$0xf]
    %v301 = vld [vmem:[#allocation5 + $0x2a0] sm:$0xf]
    %v302 = vld [vmem:[#allocation5 + $0x2a4] sm:$0xf]
    %v303 = vld [vmem:[#allocation5 + $0x2a8] sm:$0xf]
    %v304 = vld [vmem:[#allocation5 + $0x2ac] sm:$0xf]
    %v305 = vld [vmem:[#allocation5 + $0x2b0] sm:$0xf]
    %v306 = vld [vmem:[#allocation5 + $0x2b4] sm:$0xf]
    %v307 = vld [vmem:[#allocation5 + $0x2b8] sm:$0xf]
    %v308 = vld [vmem:[#allocation5 + $0x2bc] sm:$0xf]
    %v309 = vld [vmem:[#allocation5 + $0x2c0] sm:$0xf]
    %v310 = vld [vmem:[#allocation5 + $0x2c4] sm:$0xf]
    %v311 = vld [vmem:[#allocation5 + $0x2c8] sm:$0xf]
    %v312 = vld [vmem:[#allocation5 + $0x2cc] sm:$0xf]
    %v313 = vld [vmem:[#allocation5 + $0x2d0] sm:$0xf]
    %v314 = vld [vmem:[#allocation5 + $0x2d4] sm:$0xf]
    %v315 = vld [vmem:[#allocation5 + $0x2d8] sm:$0xf]
    %v316 = vld [vmem:[#allocation5 + $0x2dc] sm:$0xf]
    %v317 = vld [vmem:[#allocation5 + $0x2e0] sm:$0xf]
    %v318 = vld [vmem:[#allocation5 + $0x2e4] sm:$0xf]
    %v319 = vld [vmem:[#allocation5 + $0x2e8] sm:$0xf]
    %v320 = vld [vmem:[#allocation5 + $0x2ec] sm:$0xf]
    %v321 = vld [vmem:[#allocation5 + $0x2f0] sm:$0xf]
    %v322 = vld [vmem:[#allocation5 + $0x2f4] sm:$0xf]
    %v323 = vld [vmem:[#allocation5 + $0x2f8] sm:$0xf]
    %v324 = vld [vmem:[#allocation5 + $0x2fc] sm:$0xf]
    %v325 = vld [vmem:[#allocation5 + $0x300] sm:$0xf]
    %v326 = vld [vmem:[#allocation5 + $0x304] sm:$0xf]
    %v327 = vld [vmem:[#allocation5 + $0x308] sm:$0xf]
    %v328 = vld [vmem:[#allocation5 + $0x30c] sm:$0xf]
    %v329 = vld [vmem:[#allocation5 + $0x310] sm:$0xf]
    %v330 = vld [vmem:[#allocation5 + $0x314] sm:$0xf]
    %v331 = vld [vmem:[#allocation5 + $0x318] sm:$0xf]
    %v332 = vld [vmem:[#allocation5 + $0x31c] sm:$0xf]
    %v333 = vld [vmem:[#allocation5 + $0x320] sm:$0xf]
    %v334 = vld [vmem:[#allocation5 + $0x324] sm:$0xf]
    %v335 = vld [vmem:[#allocation5 + $0x328] sm:$0xf]
    %v336 = vld [vmem:[#allocation5 + $0x32c] sm:$0xf]
    %v337 = vld [vmem:[#allocation5 + $0x330] sm:$0xf]
    %v338 = vld [vmem:[#allocation5 + $0x334] sm:$0xf]
    %v339 = vld [vmem:[#allocation5 + $0x338] sm:$0xf]
    %v340 = vld [vmem:[#allocation5 + $0x33c] sm:$0xf]
    %v341 = vld [vmem:[#allocation5 + $0x340] sm:$0xf]
    %v342 = vld [vmem:[#allocation5 + $0x344] sm:$0xf]
    %v343 = vld [vmem:[#allocation5 + $0x348] sm:$0xf]
    %v344 = vld [vmem:[#allocation5 + $0x34c] sm:$0xf]
    %v345 = vld [vmem:[#allocation5 + $0x350] sm:$0xf]
    %v346 = vld [vmem:[#allocation5 + $0x354] sm:$0xf]
    %v347 = vld [vmem:[#allocation5 + $0x358] sm:$0xf]
    %v348 = vld [vmem:[#allocation5 + $0x35c] sm:$0xf]
    %v349 = vld [vmem:[#allocation5 + $0x360] sm:$0xf]
    %v350 = vld [vmem:[#allocation5 + $0x364] sm:$0xf]
    %v351 = vld [vmem:[#allocation5 + $0x368] sm:$0xf]
    %v352 = vld [vmem:[#allocation5 + $0x36c] sm:$0xf]
    %v353 = vld [vmem:[#allocation5 + $0x370] sm:$0xf]
    %v354 = vld [vmem:[#allocation5 + $0x374] sm:$0xf]
    %v355 = vld [vmem:[#allocation5 + $0x378] sm:$0xf]
    %v356 = vld [vmem:[#allocation5 + $0x37c] sm:$0xf]
    %v357 = vld [vmem:[#allocation5 + $0x380] sm:$0xf]
    %v358 = vld [vmem:[#allocation5 + $0x384] sm:$0xf]
    %v359 = vld [vmem:[#allocation5 + $0x388] sm:$0xf]
    %v360 = vld [vmem:[#allocation5 + $0x38c] sm:$0xf]
    %v361 = vld [vmem:[#allocation5 + $0x390] sm:$0xf]
    %v362 = vld [vmem:[#allocation5 + $0x394] sm:$0xf]
    %v363 = vld [vmem:[#allocation5 + $0x398] sm:$0xf]
    %v364 = vld [vmem:[#allocation5 + $0x39c] sm:$0xf]
    %v365 = vld [vmem:[#allocation5 + $0x3a0] sm:$0xf]
    %v366 = vld [vmem:[#allocation5 + $0x3a4] sm:$0xf]
    %v367 = vld [vmem:[#allocation5 + $0x3a8] sm:$0xf]
    %v368 = vld [vmem:[#allocation5 + $0x3ac] sm:$0xf]
    %v369 = vld [vmem:[#allocation5 + $0x3b0] sm:$0xf]
    %v370 = vld [vmem:[#allocation5 + $0x3b4] sm:$0xf]
    %v371 = vld [vmem:[#allocation5 + $0x3b8] sm:$0xf]
    %v372 = vld [vmem:[#allocation5 + $0x3bc] sm:$0xf]
    %v373 = vld [vmem:[#allocation5 + $0x3c0] sm:$0xf]
    %v374 = vld [vmem:[#allocation5 + $0x3c4] sm:$0xf]
    %v375 = vld [vmem:[#allocation5 + $0x3c8] sm:$0xf]
    %v376 = vld [vmem:[#allocation5 + $0x3cc] sm:$0xf]
    %v377 = vld [vmem:[#allocation5 + $0x3d0] sm:$0xf]
    %v378 = vld [vmem:[#allocation5 + $0x3d4] sm:$0xf]
    %v379 = vld [vmem:[#allocation5 + $0x3d8] sm:$0xf]
    %v380 = vld [vmem:[#allocation5 + $0x3dc] sm:$0xf]
    %v381 = vld [vmem:[#allocation5 + $0x3e0] sm:$0xf]
    %v382 = vld [vmem:[#allocation5 + $0x3e4] sm:$0xf]
    %v383 = vld [vmem:[#allocation5 + $0x3e8] sm:$0xf]
    %v384 = vld [vmem:[#allocation5 + $0x3ec] sm:$0xf]
    %v385 = vld [vmem:[#allocation5 + $0x3f0] sm:$0xf]
    %v386 = vld [vmem:[#allocation5 + $0x3f4] sm:$0xf]
    %v387 = vld [vmem:[#allocation5 + $0x3f8] sm:$0xf]
    %v388 = vld [vmem:[#allocation5 + $0x3fc] sm:$0xf]
    %v389 = vld [vmem:[#allocation5 + $0x400] sm:$0xf]
    %v390 = vld [vmem:[#allocation5 + $0x404] sm:$0xf]
    %v391 = vld [vmem:[#allocation5 + $0x408] sm:$0xf]
    %v392 = vld [vmem:[#allocation5 + $0x40c] sm:$0xf]
    %v393 = vld [vmem:[#allocation5 + $0x410] sm:$0xf]
    %v394 = vld [vmem:[#allocation5 + $0x414] sm:$0xf]
    %v395 = vld [vmem:[#allocation5 + $0x418] sm:$0xf]
    %v396 = vld [vmem:[#allocation5 + $0x41c] sm:$0xf]
    %v397 = vld [vmem:[#allocation5 + $0x420] sm:$0xf]
    %v398 = vld [vmem:[#allocation5 + $0x424] sm:$0xf]
    %v399 = vld [vmem:[#allocation5 + $0x428] sm:$0xf]
    %v400 = vld [vmem:[#allocation5 + $0x42c] sm:$0xf]
    %v401 = vld [vmem:[#allocation5 + $0x430] sm:$0xf]
    %v402 = vld [vmem:[#allocation5 + $0x434] sm:$0xf]
    %v403 = vld [vmem:[#allocation5 + $0x438] sm:$0xf]
    %v404 = vld [vmem:[#allocation5 + $0x43c] sm:$0xf]
    %v405 = vld [vmem:[#allocation5 + $0x440] sm:$0xf]
    %v406 = vld [vmem:[#allocation5 + $0x444] sm:$0xf]
    %v407 = vld [vmem:[#allocation5 + $0x448] sm:$0xf]
    %v408 = vld [vmem:[#allocation5 + $0x44c] sm:$0xf]
    %v409 = vld [vmem:[#allocation5 + $0x450] sm:$0xf]
    %v410 = vld [vmem:[#allocation5 + $0x454] sm:$0xf]
    %v411 = vld [vmem:[#allocation5 + $0x458] sm:$0xf]
    %v412 = vld [vmem:[#allocation5 + $0x45c] sm:$0xf]
    %v413 = vld [vmem:[#allocation5 + $0x460] sm:$0xf]
    %v414 = vld [vmem:[#allocation5 + $0x464] sm:$0xf]
    %v415 = vld [vmem:[#allocation5 + $0x468] sm:$0xf]
    %v416 = vld [vmem:[#allocation5 + $0x46c] sm:$0xf]
    %v417 = vld [vmem:[#allocation5 + $0x470] sm:$0xf]
    %v418 = vld [vmem:[#allocation5 + $0x474] sm:$0xf]
    %v419 = vld [vmem:[#allocation5 + $0x478] sm:$0xf]
    %v420 = vld [vmem:[#allocation5 + $0x47c] sm:$0xf]
    %v421 = vld [vmem:[#allocation5 + $0x480] sm:$0xf]
    %v422 = vld [vmem:[#allocation5 + $0x484] sm:$0xf]
    %v423 = vld [vmem:[#allocation5 + $0x488] sm:$0xf]
    %v424 = vld [vmem:[#allocation5 + $0x48c] sm:$0xf]
    %v425 = vld [vmem:[#allocation5 + $0x490] sm:$0xf]
    %v426 = vld [vmem:[#allocation5 + $0x494] sm:$0xf]
    %v427 = vld [vmem:[#allocation5 + $0x498] sm:$0xf]
    %v428 = vld [vmem:[#allocation5 + $0x49c] sm:$0xf]
    %v429 = vld [vmem:[#allocation5 + $0x4a0] sm:$0xf]
    %v430 = vld [vmem:[#allocation5 + $0x4a4] sm:$0xf]
    %v431 = vld [vmem:[#allocation5 + $0x4a8] sm:$0xf]
    %v432 = vld [vmem:[#allocation5 + $0x4ac] sm:$0xf]
    %v433 = vld [vmem:[#allocation5 + $0x4b0] sm:$0xf]
    %v434 = vld [vmem:[#allocation5 + $0x4b4] sm:$0xf]
    %v435 = vld [vmem:[#allocation5 + $0x4b8] sm:$0xf]
    %v436 = vld [vmem:[#allocation5 + $0x4bc] sm:$0xf]
    %v437 = vld [vmem:[#allocation5 + $0x4c0] sm:$0xf]
    %v438 = vld [vmem:[#allocation5 + $0x4c4] sm:$0xf]
    %v439 = vld [vmem:[#allocation5 + $0x4c8] sm:$0xf]
    %v440 = vld [vmem:[#allocation5 + $0x4cc] sm:$0xf]
    %v441 = vld [vmem:[#allocation5 + $0x4d0] sm:$0xf]
    %v442 = vld [vmem:[#allocation5 + $0x4d4] sm:$0xf]
    %v443 = vld [vmem:[#allocation5 + $0x4d8] sm:$0xf]
    %v444 = vld [vmem:[#allocation5 + $0x4dc] sm:$0xf]
    %v445 = vld [vmem:[#allocation5 + $0x4e0] sm:$0xf]
    %v446 = vld [vmem:[#allocation5 + $0x4e4] sm:$0xf]
    %v447 = vld [vmem:[#allocation5 + $0x4e8] sm:$0xf]
    %v448 = vld [vmem:[#allocation5 + $0x4ec] sm:$0xf]
    %v449 = vld [vmem:[#allocation5 + $0x4f0] sm:$0xf]
    %v450 = vld [vmem:[#allocation5 + $0x4f4] sm:$0xf]
    %v451 = vld [vmem:[#allocation5 + $0x4f8] sm:$0xf]
    %v452 = vld [vmem:[#allocation5 + $0x4fc] sm:$0xf]
    %v453 = vld [vmem:[#allocation5 + $0x500] sm:$0xf]
    %v454 = vld [vmem:[#allocation5 + $0x504] sm:$0xf]
    %v455 = vld [vmem:[#allocation5 + $0x508] sm:$0xf]
    %v456 = vld [vmem:[#allocation5 + $0x50c] sm:$0xf]
    %v457 = vld [vmem:[#allocation5 + $0x510] sm:$0xf]
    %v458 = vld [vmem:[#allocation5 + $0x514] sm:$0xf]
    %v459 = vld [vmem:[#allocation5 + $0x518] sm:$0xf]
    %v460 = vld [vmem:[#allocation5 + $0x51c] sm:$0xf]
    %v461 = vld [vmem:[#allocation5 + $0x520] sm:$0xf]
    %v462 = vld [vmem:[#allocation5 + $0x524] sm:$0xf]
    %v463 = vld [vmem:[#allocation5 + $0x528] sm:$0xf]
    %v464 = vld [vmem:[#allocation5 + $0x52c] sm:$0xf]
    %v465 = vld [vmem:[#allocation5 + $0x530] sm:$0xf]
    %v466 = vld [vmem:[#allocation5 + $0x534] sm:$0xf]
    %v467 = vld [vmem:[#allocation5 + $0x538] sm:$0xf]
    %v468 = vld [vmem:[#allocation5 + $0x53c] sm:$0xf]
    %v469 = vld [vmem:[#allocation5 + $0x540] sm:$0xf]
    %v470 = vld [vmem:[#allocation5 + $0x544] sm:$0xf]
    %v471 = vld [vmem:[#allocation5 + $0x548] sm:$0xf]
    %v472 = vld [vmem:[#allocation5 + $0x54c] sm:$0xf]
    %v473 = vld [vmem:[#allocation5 + $0x550] sm:$0xf]
    %v474 = vld [vmem:[#allocation5 + $0x554] sm:$0xf]
    %v475 = vld [vmem:[#allocation5 + $0x558] sm:$0xf]
    %v476 = vld [vmem:[#allocation5 + $0x55c] sm:$0xf]
    %v477 = vld [vmem:[#allocation5 + $0x560] sm:$0xf]
    %v478 = vld [vmem:[#allocation5 + $0x564] sm:$0xf]
    %v479 = vld [vmem:[#allocation5 + $0x568] sm:$0xf]
    %v480 = vld [vmem:[#allocation5 + $0x56c] sm:$0xf]
    %v481 = vld [vmem:[#allocation5 + $0x570] sm:$0xf]
    %v482 = vld [vmem:[#allocation5 + $0x574] sm:$0xf]
    %v483 = vld [vmem:[#allocation5 + $0x578] sm:$0xf]
    %v484 = vld [vmem:[#allocation5 + $0x57c] sm:$0xf]
    %v485 = vld [vmem:[#allocation5 + $0x580] sm:$0xf]
    %v486 = vld [vmem:[#allocation5 + $0x584] sm:$0xf]
    %v487 = vld [vmem:[#allocation5 + $0x588] sm:$0xf]
    %v488 = vld [vmem:[#allocation5 + $0x58c] sm:$0xf]
    %v489 = vld [vmem:[#allocation5 + $0x590] sm:$0xf]
    %v490 = vld [vmem:[#allocation5 + $0x594] sm:$0xf]
    %v491 = vld [vmem:[#allocation5 + $0x598] sm:$0xf]
    %v492 = vld [vmem:[#allocation5 + $0x59c] sm:$0xf]
    %v493 = vld [vmem:[#allocation5 + $0x5a0] sm:$0xf]
    %v494 = vld [vmem:[#allocation5 + $0x5a4] sm:$0xf]
    %v495 = vld [vmem:[#allocation5 + $0x5a8] sm:$0xf]
    %v496 = vld [vmem:[#allocation5 + $0x5ac] sm:$0xf]
    %v497 = vld [vmem:[#allocation5 + $0x5b0] sm:$0xf]
    %v498 = vld [vmem:[#allocation5 + $0x5b4] sm:$0xf]
    %v499 = vld [vmem:[#allocation5 + $0x5b8] sm:$0xf]
    %v500 = vld [vmem:[#allocation5 + $0x5bc] sm:$0xf]
    %v501 = vld [vmem:[#allocation5 + $0x5c0] sm:$0xf]
    %v502 = vld [vmem:[#allocation5 + $0x5c4] sm:$0xf]
    %v503 = vld [vmem:[#allocation5 + $0x5c8] sm:$0xf]
    %v504 = vld [vmem:[#allocation5 + $0x5cc] sm:$0xf]
    %v505 = vld [vmem:[#allocation5 + $0x5d0] sm:$0xf]
    %v506 = vld [vmem:[#allocation5 + $0x5d4] sm:$0xf]
    %v507 = vld [vmem:[#allocation5 + $0x5d8] sm:$0xf]
    %v508 = vld [vmem:[#allocation5 + $0x5dc] sm:$0xf]
    %v509 = vld [vmem:[#allocation5 + $0x5e0] sm:$0xf]
    %v510 = vld [vmem:[#allocation5 + $0x5e4] sm:$0xf]
    %v511 = vld [vmem:[#allocation5 + $0x5e8] sm:$0xf]
    %v512 = vld [vmem:[#allocation5 + $0x5ec] sm:$0xf]
    %v513 = vld [vmem:[#allocation5 + $0x5f0] sm:$0xf]
    %v514 = vld [vmem:[#allocation5 + $0x5f4] sm:$0xf]
    %v515 = vld [vmem:[#allocation5 + $0x5f8] sm:$0xf]
    %v516 = vld [vmem:[#allocation5 + $0x5fc] sm:$0xf]
    %v529 = vunpack.c.l.b16 %v121
    %v530 = vunpack.c.h.b16 %v121
    %v531 = vunpack.c.l.b16 %v122
    %v532 = vunpack.c.h.b16 %v122
    %v533 = vunpack.c.l.b16 %v123
    %v534 = vunpack.c.h.b16 %v123
    %v535 = vunpack.c.l.b16 %v124
    %v536 = vunpack.c.h.b16 %v124
    %v537 = vunpack.c.l.b16 %v125
    %v538 = vunpack.c.h.b16 %v125
    %v539 = vunpack.c.l.b16 %v126
    %v540 = vunpack.c.h.b16 %v126
    %v541 = vunpack.c.l.b16 %v127
    %v542 = vunpack.c.h.b16 %v127
    %v543 = vunpack.c.l.b16 %v128
    %v544 = vunpack.c.h.b16 %v128
    %v545 = vunpack.c.l.b16 %v129
    %v546 = vunpack.c.h.b16 %v129
    %v547 = vunpack.c.l.b16 %v130
    %v548 = vunpack.c.h.b16 %v130
    %v549 = vunpack.c.l.b16 %v131
    %v550 = vunpack.c.h.b16 %v131
    %v551 = vunpack.c.l.b16 %v132
    %v552 = vunpack.c.h.b16 %v132
    %v553 = vpack.c.b16 %v529, %v529
    %v554 = vpack.c.b16 %v530, %v530
    %v555 = vpack.c.b16 %v531, %v531
    %v556 = vpack.c.b16 %v532, %v532
    %v557 = vpack.c.b16 %v533, %v533
    %v558 = vpack.c.b16 %v534, %v534
    %v559 = vpack.c.b16 %v535, %v535
    %v560 = vpack.c.b16 %v536, %v536
    %v561 = vpack.c.b16 %v537, %v537
    %v562 = vpack.c.b16 %v538, %v538
    %v563 = vpack.c.b16 %v539, %v539
    %v564 = vpack.c.b16 %v540, %v540
    %v565 = vpack.c.b16 %v541, %v541
    %v566 = vpack.c.b16 %v542, %v542
    %v567 = vpack.c.b16 %v543, %v543
    %v568 = vpack.c.b16 %v544, %v544
    %v569 = vpack.c.b16 %v545, %v545
    %v570 = vpack.c.b16 %v546, %v546
    %v571 = vpack.c.b16 %v547, %v547
    %v572 = vpack.c.b16 %v548, %v548
    %v573 = vpack.c.b16 %v549, %v549
    %v574 = vpack.c.b16 %v550, %v550
    %v575 = vpack.c.b16 %v551, %v551
    %v576 = vpack.c.b16 %v552, %v552
    %v985 = vunpack.c.l.b16 %v133
    %v986 = vunpack.c.l.b16 %v134
    %v987 = vunpack.c.l.b16 %v135
    %v988 = vunpack.c.l.b16 %v136
    %v989 = vunpack.c.l.b16 %v137
    %v990 = vunpack.c.l.b16 %v138
    %v991 = vunpack.c.l.b16 %v139
    %v992 = vunpack.c.l.b16 %v140
    %v993 = vunpack.c.l.b16 %v141
    %v994 = vunpack.c.l.b16 %v142
    %v995 = vunpack.c.l.b16 %v143
    %v996 = vunpack.c.l.b16 %v144
    %v997 = vunpack.c.l.b16 %v145
    %v998 = vunpack.c.l.b16 %v146
    %v999 = vunpack.c.l.b16 %v147
    %v1000 = vunpack.c.l.b16 %v148
    %v1001 = vunpack.c.l.b16 %v149
    %v1002 = vunpack.c.l.b16 %v150
    %v1003 = vunpack.c.l.b16 %v151
    %v1004 = vunpack.c.l.b16 %v152
    %v1005 = vunpack.c.l.b16 %v153
    %v1006 = vunpack.c.l.b16 %v154
    %v1007 = vunpack.c.l.b16 %v155
    %v1008 = vunpack.c.l.b16 %v156
    %v1009 = vunpack.c.l.b16 %v157
    %v1010 = vunpack.c.l.b16 %v158
    %v1011 = vunpack.c.l.b16 %v159
    %v1012 = vunpack.c.l.b16 %v160
    %v1013 = vunpack.c.l.b16 %v161
    %v1014 = vunpack.c.l.b16 %v162
    %v1015 = vunpack.c.l.b16 %v163
    %v1016 = vunpack.c.l.b16 %v164
    %v1017 = vunpack.c.l.b16 %v165
    %v1018 = vunpack.c.l.b16 %v166
    %v1019 = vunpack.c.l.b16 %v167
    %v1020 = vunpack.c.l.b16 %v168
    %v1021 = vunpack.c.l.b16 %v169
    %v1022 = vunpack.c.l.b16 %v170
    %v1023 = vunpack.c.l.b16 %v171
    %v1024 = vunpack.c.l.b16 %v172
    %v1025 = vunpack.c.l.b16 %v173
    %v1026 = vunpack.c.l.b16 %v174
    %v1027 = vunpack.c.l.b16 %v175
    %v1028 = vunpack.c.l.b16 %v176
    %v1029 = vunpack.c.l.b16 %v177
    %v1030 = vunpack.c.l.b16 %v178
    %v1031 = vunpack.c.l.b16 %v179
    %v1032 = vunpack.c.l.b16 %v180
    %v1033 = vunpack.c.l.b16 %v181
    %v1034 = vunpack.c.l.b16 %v182
    %v1035 = vunpack.c.l.b16 %v183
    %v1036 = vunpack.c.l.b16 %v184
    %v1037 = vunpack.c.l.b16 %v185
    %v1038 = vunpack.c.l.b16 %v186
    %v1039 = vunpack.c.l.b16 %v187
    %v1040 = vunpack.c.l.b16 %v188
    %v1041 = vunpack.c.l.b16 %v189
    %v1042 = vunpack.c.l.b16 %v190
    %v1043 = vunpack.c.l.b16 %v191
    %v1044 = vunpack.c.l.b16 %v192
    %v1045 = vunpack.c.l.b16 %v193
    %v1046 = vunpack.c.l.b16 %v194
    %v1047 = vunpack.c.l.b16 %v195
    %v1048 = vunpack.c.l.b16 %v196
    %v1049 = vunpack.c.l.b16 %v197
    %v1050 = vunpack.c.l.b16 %v198
    %v1051 = vunpack.c.l.b16 %v199
    %v1052 = vunpack.c.l.b16 %v200
    %v1053 = vunpack.c.l.b16 %v201
    %v1054 = vunpack.c.l.b16 %v202
    %v1055 = vunpack.c.l.b16 %v203
    %v1056 = vunpack.c.l.b16 %v204
    %v1057 = vunpack.c.l.b16 %v205
    %v1058 = vunpack.c.l.b16 %v206
    %v1059 = vunpack.c.l.b16 %v207
    %v1060 = vunpack.c.l.b16 %v208
    %v1061 = vunpack.c.l.b16 %v209
    %v1062 = vunpack.c.l.b16 %v210
    %v1063 = vunpack.c.l.b16 %v211
    %v1064 = vunpack.c.l.b16 %v212
    %v1065 = vunpack.c.l.b16 %v213
    %v1066 = vunpack.c.l.b16 %v214
    %v1067 = vunpack.c.l.b16 %v215
    %v1068 = vunpack.c.l.b16 %v216
    %v1069 = vunpack.c.l.b16 %v217
    %v1070 = vunpack.c.l.b16 %v218
    %v1071 = vunpack.c.l.b16 %v219
    %v1072 = vunpack.c.l.b16 %v220
    %v1073 = vunpack.c.l.b16 %v221
    %v1074 = vunpack.c.l.b16 %v222
    %v1075 = vunpack.c.l.b16 %v223
    %v1076 = vunpack.c.l.b16 %v224
    %v1077 = vunpack.c.l.b16 %v225
    %v1078 = vunpack.c.l.b16 %v226
    %v1079 = vunpack.c.l.b16 %v227
    %v1080 = vunpack.c.l.b16 %v228
    %v1081 = vunpack.c.l.b16 %v229
    %v1082 = vunpack.c.l.b16 %v230
    %v1083 = vunpack.c.l.b16 %v231
    %v1084 = vunpack.c.l.b16 %v232
    %v1085 = vunpack.c.l.b16 %v233
    %v1086 = vunpack.c.l.b16 %v234
    %v1087 = vunpack.c.l.b16 %v235
    %v1088 = vunpack.c.l.b16 %v236
    %v1089 = vunpack.c.l.b16 %v237
    %v1090 = vunpack.c.l.b16 %v238
    %v1091 = vunpack.c.l.b16 %v239
    %v1092 = vunpack.c.l.b16 %v240
    %v1093 = vunpack.c.l.b16 %v241
    %v1094 = vunpack.c.l.b16 %v242
    %v1095 = vunpack.c.l.b16 %v243
    %v1096 = vunpack.c.l.b16 %v244
    %v1097 = vunpack.c.l.b16 %v245
    %v1098 = vunpack.c.l.b16 %v246
    %v1099 = vunpack.c.l.b16 %v247
    %v1100 = vunpack.c.l.b16 %v248
    %v1101 = vunpack.c.l.b16 %v249
    %v1102 = vunpack.c.l.b16 %v250
    %v1103 = vunpack.c.l.b16 %v251
    %v1104 = vunpack.c.l.b16 %v252
    %v1105 = vunpack.c.l.b16 %v253
    %v1106 = vunpack.c.l.b16 %v254
    %v1107 = vunpack.c.l.b16 %v255
    %v1108 = vunpack.c.l.b16 %v256
    %v1109 = vunpack.c.l.b16 %v257
    %v1110 = vunpack.c.l.b16 %v258
    %v1111 = vunpack.c.l.b16 %v259
    %v1112 = vunpack.c.l.b16 %v260
    %v1113 = vunpack.c.l.b16 %v261
    %v1114 = vunpack.c.l.b16 %v262
    %v1115 = vunpack.c.l.b16 %v263
    %v1116 = vunpack.c.l.b16 %v264
    %v1117 = vunpack.c.l.b16 %v265
    %v1118 = vunpack.c.l.b16 %v266
    %v1119 = vunpack.c.l.b16 %v267
    %v1120 = vunpack.c.l.b16 %v268
    %v1121 = vunpack.c.l.b16 %v269
    %v1122 = vunpack.c.l.b16 %v270
    %v1123 = vunpack.c.l.b16 %v271
    %v1124 = vunpack.c.l.b16 %v272
    %v1125 = vunpack.c.l.b16 %v273
    %v1126 = vunpack.c.l.b16 %v274
    %v1127 = vunpack.c.l.b16 %v275
    %v1128 = vunpack.c.l.b16 %v276
    %v1129 = vunpack.c.l.b16 %v277
    %v1130 = vunpack.c.l.b16 %v278
    %v1131 = vunpack.c.l.b16 %v279
    %v1132 = vunpack.c.l.b16 %v280
    %v1133 = vunpack.c.l.b16 %v281
    %v1134 = vunpack.c.l.b16 %v282
    %v1135 = vunpack.c.l.b16 %v283
    %v1136 = vunpack.c.l.b16 %v284
    %v1137 = vunpack.c.l.b16 %v285
    %v1138 = vunpack.c.l.b16 %v286
    %v1139 = vunpack.c.l.b16 %v287
    %v1140 = vunpack.c.l.b16 %v288
    %v1141 = vunpack.c.l.b16 %v289
    %v1142 = vunpack.c.l.b16 %v290
    %v1143 = vunpack.c.l.b16 %v291
    %v1144 = vunpack.c.l.b16 %v292
    %v1145 = vunpack.c.l.b16 %v293
    %v1146 = vunpack.c.l.b16 %v294
    %v1147 = vunpack.c.l.b16 %v295
    %v1148 = vunpack.c.l.b16 %v296
    %v1149 = vunpack.c.l.b16 %v297
    %v1150 = vunpack.c.l.b16 %v298
    %v1151 = vunpack.c.l.b16 %v299
    %v1152 = vunpack.c.l.b16 %v300
    %v1153 = vunpack.c.l.b16 %v301
    %v1154 = vunpack.c.l.b16 %v302
    %v1155 = vunpack.c.l.b16 %v303
    %v1156 = vunpack.c.l.b16 %v304
    %v1157 = vunpack.c.l.b16 %v305
    %v1158 = vunpack.c.l.b16 %v306
    %v1159 = vunpack.c.l.b16 %v307
    %v1160 = vunpack.c.l.b16 %v308
    %v1161 = vunpack.c.l.b16 %v309
    %v1162 = vunpack.c.l.b16 %v310
    %v1163 = vunpack.c.l.b16 %v311
    %v1164 = vunpack.c.l.b16 %v312
    %v1165 = vunpack.c.l.b16 %v313
    %v1166 = vunpack.c.l.b16 %v314
    %v1167 = vunpack.c.l.b16 %v315
    %v1168 = vunpack.c.l.b16 %v316
    %v1169 = vunpack.c.l.b16 %v317
    %v1170 = vunpack.c.l.b16 %v318
    %v1171 = vunpack.c.l.b16 %v319
    %v1172 = vunpack.c.l.b16 %v320
    %v1173 = vunpack.c.l.b16 %v321
    %v1174 = vunpack.c.l.b16 %v322
    %v1175 = vunpack.c.l.b16 %v323
    %v1176 = vunpack.c.l.b16 %v324
    %v1177 = vunpack.c.l.b16 %v325
    %v1178 = vunpack.c.l.b16 %v326
    %v1179 = vunpack.c.l.b16 %v327
    %v1180 = vunpack.c.l.b16 %v328
    %v1181 = vunpack.c.l.b16 %v329
    %v1182 = vunpack.c.l.b16 %v330
    %v1183 = vunpack.c.l.b16 %v331
    %v1184 = vunpack.c.l.b16 %v332
    %v1185 = vunpack.c.l.b16 %v333
    %v1186 = vunpack.c.l.b16 %v334
    %v1187 = vunpack.c.l.b16 %v335
    %v1188 = vunpack.c.l.b16 %v336
    %v1189 = vunpack.c.l.b16 %v337
    %v1190 = vunpack.c.l.b16 %v338
    %v1191 = vunpack.c.l.b16 %v339
    %v1192 = vunpack.c.l.b16 %v340
    %v1193 = vunpack.c.l.b16 %v341
    %v1194 = vunpack.c.l.b16 %v342
    %v1195 = vunpack.c.l.b16 %v343
    %v1196 = vunpack.c.l.b16 %v344
    %v1197 = vunpack.c.l.b16 %v345
    %v1198 = vunpack.c.l.b16 %v346
    %v1199 = vunpack.c.l.b16 %v347
    %v1200 = vunpack.c.l.b16 %v348
    %v1201 = vunpack.c.l.b16 %v349
    %v1202 = vunpack.c.l.b16 %v350
    %v1203 = vunpack.c.l.b16 %v351
    %v1204 = vunpack.c.l.b16 %v352
    %v1205 = vunpack.c.l.b16 %v353
    %v1206 = vunpack.c.l.b16 %v354
    %v1207 = vunpack.c.l.b16 %v355
    %v1208 = vunpack.c.l.b16 %v356
    %v1209 = vunpack.c.l.b16 %v357
    %v1210 = vunpack.c.l.b16 %v358
    %v1211 = vunpack.c.l.b16 %v359
    %v1212 = vunpack.c.l.b16 %v360
    %v1213 = vunpack.c.l.b16 %v361
    %v1214 = vunpack.c.l.b16 %v362
    %v1215 = vunpack.c.l.b16 %v363
    %v1216 = vunpack.c.l.b16 %v364
    %v1217 = vunpack.c.l.b16 %v365
    %v1218 = vunpack.c.l.b16 %v366
    %v1219 = vunpack.c.l.b16 %v367
    %v1220 = vunpack.c.l.b16 %v368
    %v1221 = vunpack.c.l.b16 %v369
    %v1222 = vunpack.c.l.b16 %v370
    %v1223 = vunpack.c.l.b16 %v371
    %v1224 = vunpack.c.l.b16 %v372
    %v1225 = vunpack.c.l.b16 %v373
    %v1226 = vunpack.c.l.b16 %v374
    %v1227 = vunpack.c.l.b16 %v375
    %v1228 = vunpack.c.l.b16 %v376
    %v1229 = vunpack.c.l.b16 %v377
    %v1230 = vunpack.c.l.b16 %v378
    %v1231 = vunpack.c.l.b16 %v379
    %v1232 = vunpack.c.l.b16 %v380
    %v1233 = vunpack.c.l.b16 %v381
    %v1234 = vunpack.c.l.b16 %v382
    %v1235 = vunpack.c.l.b16 %v383
    %v1236 = vunpack.c.l.b16 %v384
    %v1237 = vunpack.c.l.b16 %v385
    %v1238 = vunpack.c.l.b16 %v386
    %v1239 = vunpack.c.l.b16 %v387
    %v1240 = vunpack.c.l.b16 %v388
    %v1241 = vunpack.c.l.b16 %v389
    %v1242 = vunpack.c.l.b16 %v390
    %v1243 = vunpack.c.l.b16 %v391
    %v1244 = vunpack.c.l.b16 %v392
    %v1245 = vunpack.c.l.b16 %v393
    %v1246 = vunpack.c.l.b16 %v394
    %v1247 = vunpack.c.l.b16 %v395
    %v1248 = vunpack.c.l.b16 %v396
    %v1249 = vunpack.c.l.b16 %v397
    %v1250 = vunpack.c.l.b16 %v398
    %v1251 = vunpack.c.l.b16 %v399
    %v1252 = vunpack.c.l.b16 %v400
    %v1253 = vunpack.c.l.b16 %v401
    %v1254 = vunpack.c.l.b16 %v402
    %v1255 = vunpack.c.l.b16 %v403
    %v1256 = vunpack.c.l.b16 %v404
    %v1257 = vunpack.c.l.b16 %v405
    %v1258 = vunpack.c.l.b16 %v406
    %v1259 = vunpack.c.l.b16 %v407
    %v1260 = vunpack.c.l.b16 %v408
    %v1261 = vunpack.c.l.b16 %v409
    %v1262 = vunpack.c.l.b16 %v410
    %v1263 = vunpack.c.l.b16 %v411
    %v1264 = vunpack.c.l.b16 %v412
    %v1265 = vunpack.c.l.b16 %v413
    %v1266 = vunpack.c.l.b16 %v414
    %v1267 = vunpack.c.l.b16 %v415
    %v1268 = vunpack.c.l.b16 %v416
    %v1269 = vunpack.c.l.b16 %v417
    %v1270 = vunpack.c.l.b16 %v418
    %v1271 = vunpack.c.l.b16 %v419
    %v1272 = vunpack.c.l.b16 %v420
    %v1273 = vunpack.c.l.b16 %v421
    %v1274 = vunpack.c.l.b16 %v422
    %v1275 = vunpack.c.l.b16 %v423
    %v1276 = vunpack.c.l.b16 %v424
    %v1277 = vunpack.c.l.b16 %v425
    %v1278 = vunpack.c.l.b16 %v426
    %v1279 = vunpack.c.l.b16 %v427
    %v1280 = vunpack.c.l.b16 %v428
    %v1281 = vunpack.c.l.b16 %v429
    %v1282 = vunpack.c.l.b16 %v430
    %v1283 = vunpack.c.l.b16 %v431
    %v1284 = vunpack.c.l.b16 %v432
    %v1285 = vunpack.c.l.b16 %v433
    %v1286 = vunpack.c.l.b16 %v434
    %v1287 = vunpack.c.l.b16 %v435
    %v1288 = vunpack.c.l.b16 %v436
    %v1289 = vunpack.c.l.b16 %v437
    %v1290 = vunpack.c.l.b16 %v438
    %v1291 = vunpack.c.l.b16 %v439
    %v1292 = vunpack.c.l.b16 %v440
    %v1293 = vunpack.c.l.b16 %v441
    %v1294 = vunpack.c.l.b16 %v442
    %v1295 = vunpack.c.l.b16 %v443
    %v1296 = vunpack.c.l.b16 %v444
    %v1297 = vunpack.c.l.b16 %v445
    %v1298 = vunpack.c.l.b16 %v446
    %v1299 = vunpack.c.l.b16 %v447
    %v1300 = vunpack.c.l.b16 %v448
    %v1301 = vunpack.c.l.b16 %v449
    %v1302 = vunpack.c.l.b16 %v450
    %v1303 = vunpack.c.l.b16 %v451
    %v1304 = vunpack.c.l.b16 %v452
    %v1305 = vunpack.c.l.b16 %v453
    %v1306 = vunpack.c.l.b16 %v454
    %v1307 = vunpack.c.l.b16 %v455
    %v1308 = vunpack.c.l.b16 %v456
    %v1309 = vunpack.c.l.b16 %v457
    %v1310 = vunpack.c.l.b16 %v458
    %v1311 = vunpack.c.l.b16 %v459
    %v1312 = vunpack.c.l.b16 %v460
    %v1313 = vunpack.c.l.b16 %v461
    %v1314 = vunpack.c.l.b16 %v462
    %v1315 = vunpack.c.l.b16 %v463
    %v1316 = vunpack.c.l.b16 %v464
    %v1317 = vunpack.c.l.b16 %v465
    %v1318 = vunpack.c.l.b16 %v466
    %v1319 = vunpack.c.l.b16 %v467
    %v1320 = vunpack.c.l.b16 %v468
    %v1321 = vunpack.c.l.b16 %v469
    %v1322 = vunpack.c.l.b16 %v470
    %v1323 = vunpack.c.l.b16 %v471
    %v1324 = vunpack.c.l.b16 %v472
    %v1325 = vunpack.c.l.b16 %v473
    %v1326 = vunpack.c.l.b16 %v474
    %v1327 = vunpack.c.l.b16 %v475
    %v1328 = vunpack.c.l.b16 %v476
    %v1329 = vunpack.c.l.b16 %v477
    %v1330 = vunpack.c.l.b16 %v478
    %v1331 = vunpack.c.l.b16 %v479
    %v1332 = vunpack.c.l.b16 %v480
    %v1333 = vunpack.c.l.b16 %v481
    %v1334 = vunpack.c.l.b16 %v482
    %v1335 = vunpack.c.l.b16 %v483
    %v1336 = vunpack.c.l.b16 %v484
    %v1337 = vunpack.c.l.b16 %v485
    %v1338 = vunpack.c.l.b16 %v486
    %v1339 = vunpack.c.l.b16 %v487
    %v1340 = vunpack.c.l.b16 %v488
    %v1341 = vunpack.c.l.b16 %v489
    %v1342 = vunpack.c.l.b16 %v490
    %v1343 = vunpack.c.l.b16 %v491
    %v1344 = vunpack.c.l.b16 %v492
    %v1345 = vunpack.c.l.b16 %v493
    %v1346 = vunpack.c.l.b16 %v494
    %v1347 = vunpack.c.l.b16 %v495
    %v1348 = vunpack.c.l.b16 %v496
    %v1349 = vunpack.c.l.b16 %v497
    %v1350 = vunpack.c.l.b16 %v498
    %v1351 = vunpack.c.l.b16 %v499
    %v1352 = vunpack.c.l.b16 %v500
    %v1353 = vunpack.c.l.b16 %v501
    %v1354 = vunpack.c.l.b16 %v502
    %v1355 = vunpack.c.l.b16 %v503
    %v1356 = vunpack.c.l.b16 %v504
    %v1357 = vunpack.c.l.b16 %v505
    %v1358 = vunpack.c.l.b16 %v506
    %v1359 = vunpack.c.l.b16 %v507
    %v1360 = vunpack.c.l.b16 %v508
    %v1361 = vunpack.c.l.b16 %v509
    %v1362 = vunpack.c.l.b16 %v510
    %v1363 = vunpack.c.l.b16 %v511
    %v1364 = vunpack.c.l.b16 %v512
    %v1365 = vunpack.c.l.b16 %v513
    %v1366 = vunpack.c.l.b16 %v514
    %v1367 = vunpack.c.l.b16 %v515
    %v1368 = vunpack.c.l.b16 %v516
    %v1369 = vpack.c.b16 %v986, %v985
    %v1370 = vpack.c.b16 %v988, %v987
    %v1371 = vpack.c.b16 %v990, %v989
    %v1372 = vpack.c.b16 %v992, %v991
    %v1373 = vpack.c.b16 %v994, %v993
    %v1374 = vpack.c.b16 %v996, %v995
    %v1375 = vpack.c.b16 %v998, %v997
    %v1376 = vpack.c.b16 %v1000, %v999
    %v1377 = vpack.c.b16 %v1002, %v1001
    %v1378 = vpack.c.b16 %v1004, %v1003
    %v1379 = vpack.c.b16 %v1006, %v1005
    %v1380 = vpack.c.b16 %v1008, %v1007
    %v1381 = vpack.c.b16 %v1010, %v1009
    %v1382 = vpack.c.b16 %v1012, %v1011
    %v1383 = vpack.c.b16 %v1014, %v1013
    %v1384 = vpack.c.b16 %v1016, %v1015
    %v1385 = vpack.c.b16 %v1018, %v1017
    %v1386 = vpack.c.b16 %v1020, %v1019
    %v1387 = vpack.c.b16 %v1022, %v1021
    %v1388 = vpack.c.b16 %v1024, %v1023
    %v1389 = vpack.c.b16 %v1026, %v1025
    %v1390 = vpack.c.b16 %v1028, %v1027
    %v1391 = vpack.c.b16 %v1030, %v1029
    %v1392 = vpack.c.b16 %v1032, %v1031
    %v1393 = vpack.c.b16 %v1034, %v1033
    %v1394 = vpack.c.b16 %v1036, %v1035
    %v1395 = vpack.c.b16 %v1038, %v1037
    %v1396 = vpack.c.b16 %v1040, %v1039
    %v1397 = vpack.c.b16 %v1042, %v1041
    %v1398 = vpack.c.b16 %v1044, %v1043
    %v1399 = vpack.c.b16 %v1046, %v1045
    %v1400 = vpack.c.b16 %v1048, %v1047
    %v1401 = vpack.c.b16 %v1050, %v1049
    %v1402 = vpack.c.b16 %v1052, %v1051
    %v1403 = vpack.c.b16 %v1054, %v1053
    %v1404 = vpack.c.b16 %v1056, %v1055
    %v1405 = vpack.c.b16 %v1058, %v1057
    %v1406 = vpack.c.b16 %v1060, %v1059
    %v1407 = vpack.c.b16 %v1062, %v1061
    %v1408 = vpack.c.b16 %v1064, %v1063
    %v1409 = vpack.c.b16 %v1066, %v1065
    %v1410 = vpack.c.b16 %v1068, %v1067
    %v1411 = vpack.c.b16 %v1070, %v1069
    %v1412 = vpack.c.b16 %v1072, %v1071
    %v1413 = vpack.c.b16 %v1074, %v1073
    %v1414 = vpack.c.b16 %v1076, %v1075
    %v1415 = vpack.c.b16 %v1078, %v1077
    %v1416 = vpack.c.b16 %v1080, %v1079
    %v1417 = vpack.c.b16 %v1082, %v1081
    %v1418 = vpack.c.b16 %v1084, %v1083
    %v1419 = vpack.c.b16 %v1086, %v1085
    %v1420 = vpack.c.b16 %v1088, %v1087
    %v1421 = vpack.c.b16 %v1090, %v1089
    %v1422 = vpack.c.b16 %v1092, %v1091
    %v1423 = vpack.c.b16 %v1094, %v1093
    %v1424 = vpack.c.b16 %v1096, %v1095
    %v1425 = vpack.c.b16 %v1098, %v1097
    %v1426 = vpack.c.b16 %v1100, %v1099
    %v1427 = vpack.c.b16 %v1102, %v1101
    %v1428 = vpack.c.b16 %v1104, %v1103
    %v1429 = vpack.c.b16 %v1106, %v1105
    %v1430 = vpack.c.b16 %v1108, %v1107
    %v1431 = vpack.c.b16 %v1110, %v1109
    %v1432 = vpack.c.b16 %v1112, %v1111
    %v1433 = vpack.c.b16 %v1114, %v1113
    %v1434 = vpack.c.b16 %v1116, %v1115
    %v1435 = vpack.c.b16 %v1118, %v1117
    %v1436 = vpack.c.b16 %v1120, %v1119
    %v1437 = vpack.c.b16 %v1122, %v1121
    %v1438 = vpack.c.b16 %v1124, %v1123
    %v1439 = vpack.c.b16 %v1126, %v1125
    %v1440 = vpack.c.b16 %v1128, %v1127
    %v1441 = vpack.c.b16 %v1130, %v1129
    %v1442 = vpack.c.b16 %v1132, %v1131
    %v1443 = vpack.c.b16 %v1134, %v1133
    %v1444 = vpack.c.b16 %v1136, %v1135
    %v1445 = vpack.c.b16 %v1138, %v1137
    %v1446 = vpack.c.b16 %v1140, %v1139
    %v1447 = vpack.c.b16 %v1142, %v1141
    %v1448 = vpack.c.b16 %v1144, %v1143
    %v1449 = vpack.c.b16 %v1146, %v1145
    %v1450 = vpack.c.b16 %v1148, %v1147
    %v1451 = vpack.c.b16 %v1150, %v1149
    %v1452 = vpack.c.b16 %v1152, %v1151
    %v1453 = vpack.c.b16 %v1154, %v1153
    %v1454 = vpack.c.b16 %v1156, %v1155
    %v1455 = vpack.c.b16 %v1158, %v1157
    %v1456 = vpack.c.b16 %v1160, %v1159
    %v1457 = vpack.c.b16 %v1162, %v1161
    %v1458 = vpack.c.b16 %v1164, %v1163
    %v1459 = vpack.c.b16 %v1166, %v1165
    %v1460 = vpack.c.b16 %v1168, %v1167
    %v1461 = vpack.c.b16 %v1170, %v1169
    %v1462 = vpack.c.b16 %v1172, %v1171
    %v1463 = vpack.c.b16 %v1174, %v1173
    %v1464 = vpack.c.b16 %v1176, %v1175
    %v1465 = vpack.c.b16 %v1178, %v1177
    %v1466 = vpack.c.b16 %v1180, %v1179
    %v1467 = vpack.c.b16 %v1182, %v1181
    %v1468 = vpack.c.b16 %v1184, %v1183
    %v1469 = vpack.c.b16 %v1186, %v1185
    %v1470 = vpack.c.b16 %v1188, %v1187
    %v1471 = vpack.c.b16 %v1190, %v1189
    %v1472 = vpack.c.b16 %v1192, %v1191
    %v1473 = vpack.c.b16 %v1194, %v1193
    %v1474 = vpack.c.b16 %v1196, %v1195
    %v1475 = vpack.c.b16 %v1198, %v1197
    %v1476 = vpack.c.b16 %v1200, %v1199
    %v1477 = vpack.c.b16 %v1202, %v1201
    %v1478 = vpack.c.b16 %v1204, %v1203
    %v1479 = vpack.c.b16 %v1206, %v1205
    %v1480 = vpack.c.b16 %v1208, %v1207
    %v1481 = vpack.c.b16 %v1210, %v1209
    %v1482 = vpack.c.b16 %v1212, %v1211
    %v1483 = vpack.c.b16 %v1214, %v1213
    %v1484 = vpack.c.b16 %v1216, %v1215
    %v1485 = vpack.c.b16 %v1218, %v1217
    %v1486 = vpack.c.b16 %v1220, %v1219
    %v1487 = vpack.c.b16 %v1222, %v1221
    %v1488 = vpack.c.b16 %v1224, %v1223
    %v1489 = vpack.c.b16 %v1226, %v1225
    %v1490 = vpack.c.b16 %v1228, %v1227
    %v1491 = vpack.c.b16 %v1230, %v1229
    %v1492 = vpack.c.b16 %v1232, %v1231
    %v1493 = vpack.c.b16 %v1234, %v1233
    %v1494 = vpack.c.b16 %v1236, %v1235
    %v1495 = vpack.c.b16 %v1238, %v1237
    %v1496 = vpack.c.b16 %v1240, %v1239
    %v1497 = vpack.c.b16 %v1242, %v1241
    %v1498 = vpack.c.b16 %v1244, %v1243
    %v1499 = vpack.c.b16 %v1246, %v1245
    %v1500 = vpack.c.b16 %v1248, %v1247
    %v1501 = vpack.c.b16 %v1250, %v1249
    %v1502 = vpack.c.b16 %v1252, %v1251
    %v1503 = vpack.c.b16 %v1254, %v1253
    %v1504 = vpack.c.b16 %v1256, %v1255
    %v1505 = vpack.c.b16 %v1258, %v1257
    %v1506 = vpack.c.b16 %v1260, %v1259
    %v1507 = vpack.c.b16 %v1262, %v1261
    %v1508 = vpack.c.b16 %v1264, %v1263
    %v1509 = vpack.c.b16 %v1266, %v1265
    %v1510 = vpack.c.b16 %v1268, %v1267
    %v1511 = vpack.c.b16 %v1270, %v1269
    %v1512 = vpack.c.b16 %v1272, %v1271
    %v1513 = vpack.c.b16 %v1274, %v1273
    %v1514 = vpack.c.b16 %v1276, %v1275
    %v1515 = vpack.c.b16 %v1278, %v1277
    %v1516 = vpack.c.b16 %v1280, %v1279
    %v1517 = vpack.c.b16 %v1282, %v1281
    %v1518 = vpack.c.b16 %v1284, %v1283
    %v1519 = vpack.c.b16 %v1286, %v1285
    %v1520 = vpack.c.b16 %v1288, %v1287
    %v1521 = vpack.c.b16 %v1290, %v1289
    %v1522 = vpack.c.b16 %v1292, %v1291
    %v1523 = vpack.c.b16 %v1294, %v1293
    %v1524 = vpack.c.b16 %v1296, %v1295
    %v1525 = vpack.c.b16 %v1298, %v1297
    %v1526 = vpack.c.b16 %v1300, %v1299
    %v1527 = vpack.c.b16 %v1302, %v1301
    %v1528 = vpack.c.b16 %v1304, %v1303
    %v1529 = vpack.c.b16 %v1306, %v1305
    %v1530 = vpack.c.b16 %v1308, %v1307
    %v1531 = vpack.c.b16 %v1310, %v1309
    %v1532 = vpack.c.b16 %v1312, %v1311
    %v1533 = vpack.c.b16 %v1314, %v1313
    %v1534 = vpack.c.b16 %v1316, %v1315
    %v1535 = vpack.c.b16 %v1318, %v1317
    %v1536 = vpack.c.b16 %v1320, %v1319
    %v1537 = vpack.c.b16 %v1322, %v1321
    %v1538 = vpack.c.b16 %v1324, %v1323
    %v1539 = vpack.c.b16 %v1326, %v1325
    %v1540 = vpack.c.b16 %v1328, %v1327
    %v1541 = vpack.c.b16 %v1330, %v1329
    %v1542 = vpack.c.b16 %v1332, %v1331
    %v1543 = vpack.c.b16 %v1334, %v1333
    %v1544 = vpack.c.b16 %v1336, %v1335
    %v1545 = vpack.c.b16 %v1338, %v1337
    %v1546 = vpack.c.b16 %v1340, %v1339
    %v1547 = vpack.c.b16 %v1342, %v1341
    %v1548 = vpack.c.b16 %v1344, %v1343
    %v1549 = vpack.c.b16 %v1346, %v1345
    %v1550 = vpack.c.b16 %v1348, %v1347
    %v1551 = vpack.c.b16 %v1350, %v1349
    %v1552 = vpack.c.b16 %v1352, %v1351
    %v1553 = vpack.c.b16 %v1354, %v1353
    %v1554 = vpack.c.b16 %v1356, %v1355
    %v1555 = vpack.c.b16 %v1358, %v1357
    %v1556 = vpack.c.b16 %v1360, %v1359
    %v1557 = vpack.c.b16 %v1362, %v1361
    %v1558 = vpack.c.b16 %v1364, %v1363
    %v1559 = vpack.c.b16 %v1366, %v1365
    %v1560 = vpack.c.b16 %v1368, %v1367
    %1753 = vmatprep.subr.bf16.mxu0 0
    %1754 = vmatpush1.bf16.msra.mxu0 %v1369
    %1755 = vmatprep.subr.bf16.mxu0 0
    %1756 = vmatpush1.bf16.msra.mxu0 %v1370
    %1757 = vmatprep.subr.bf16.mxu0 0
    %1758 = vmatpush1.bf16.msra.mxu0 %v1371
    %1759 = vmatprep.subr.bf16.mxu0 0
    %1760 = vmatpush1.bf16.msra.mxu0 %v1372
    %1761 = vmatprep.subr.bf16.mxu0 0
    %1762 = vmatpush1.bf16.msra.mxu0 %v1373
    %1763 = vmatprep.subr.bf16.mxu0 0
    %1764 = vmatpush1.bf16.msra.mxu0 %v1374
    %1765 = vmatprep.subr.bf16.mxu0 0
    %1766 = vmatpush1.bf16.msra.mxu0 %v1375
    %1767 = vmatprep.subr.bf16.mxu0 0
    %1768 = vmatpush1.bf16.msra.mxu0 %v1376
    %1769 = vmatprep.subr.bf16.mxu0 0
    %1770 = vmatpush1.bf16.msra.mxu0 %v1377
    %1771 = vmatprep.subr.bf16.mxu0 0
    %1772 = vmatpush1.bf16.msra.mxu0 %v1378
    %1773 = vmatprep.subr.bf16.mxu0 0
    %1774 = vmatpush1.bf16.msra.mxu0 %v1379
    %1775 = vmatprep.subr.bf16.mxu0 0
    %1776 = vmatpush1.bf16.msra.mxu0 %v1380
    %1777 = vmatprep.subr.bf16.mxu0 0
    %1778 = vmatpush1.bf16.msra.mxu0 %v1381
    %1779 = vmatprep.subr.bf16.mxu0 0
    %1780 = vmatpush1.bf16.msra.mxu0 %v1382
    %1781 = vmatprep.subr.bf16.mxu0 0
    %1782 = vmatpush1.bf16.msra.mxu0 %v1383
    %1783 = vmatprep.subr.bf16.mxu0 0
    %1784 = vmatpush1.bf16.msra.mxu0 %v1384
    %1785 = vmatprep.mubr.bf16.mxu0 %v554
    %1786 = vmatmul.mubr.bf16.gmra.mrb[0].mxu0 %v553
    %v1787 = vpop.f32.mrb[0].mxu0
    %v1788 = vadd.f32 0.0, %v1787
    %v1789 = vpop.f32.mrb[0].mxu0
    %v1790 = vpop.f32.mrb[0].mxu0
    %v1791 = vpop.f32.mrb[0].mxu0
    %1792 = vdwg.mxu0
    %1793 = vmatprep.subr.bf16.mxu0 0
    %1794 = vmatpush1.bf16.msra.mxu0 %v1385
    %1795 = vmatprep.subr.bf16.mxu0 0
    %1796 = vmatpush1.bf16.msra.mxu0 %v1386
    %1797 = vmatprep.subr.bf16.mxu0 0
    %1798 = vmatpush1.bf16.msra.mxu0 %v1387
    %1799 = vmatprep.subr.bf16.mxu0 0
    %1800 = vmatpush1.bf16.msra.mxu0 %v1388
    %1801 = vmatprep.subr.bf16.mxu0 0
    %1802 = vmatpush1.bf16.msra.mxu0 %v1389
    %1803 = vmatprep.subr.bf16.mxu0 0
    %1804 = vmatpush1.bf16.msra.mxu0 %v1390
    %1805 = vmatprep.subr.bf16.mxu0 0
    %1806 = vmatpush1.bf16.msra.mxu0 %v1391
    %1807 = vmatprep.subr.bf16.mxu0 0
    %1808 = vmatpush1.bf16.msra.mxu0 %v1392
    %1809 = vmatprep.subr.bf16.mxu0 0
    %1810 = vmatpush1.bf16.msra.mxu0 %v1393
    %1811 = vmatprep.subr.bf16.mxu0 0
    %1812 = vmatpush1.bf16.msra.mxu0 %v1394
    %1813 = vmatprep.subr.bf16.mxu0 0
    %1814 = vmatpush1.bf16.msra.mxu0 %v1395
    %1815 = vmatprep.subr.bf16.mxu0 0
    %1816 = vmatpush1.bf16.msra.mxu0 %v1396
    %1817 = vmatprep.subr.bf16.mxu0 0
    %1818 = vmatpush1.bf16.msra.mxu0 %v1397
    %1819 = vmatprep.subr.bf16.mxu0 0
    %1820 = vmatpush1.bf16.msra.mxu0 %v1398
    %1821 = vmatprep.subr.bf16.mxu0 0
    %1822 = vmatpush1.bf16.msra.mxu0 %v1399
    %1823 = vmatprep.subr.bf16.mxu0 0
    %1824 = vmatpush1.bf16.msra.mxu0 %v1400
    %1825 = vmatprep.mubr.bf16.mxu0 %v556
    %1826 = vmatmul.mubr.bf16.gmra.mrb[0].mxu0 %v555
    %v1827 = vpop.f32.mrb[0].mxu0
    %v1828 = vadd.f32 %v1788, %v1827
    %v1829 = vpop.f32.mrb[0].mxu0
    %v1830 = vpop.f32.mrb[0].mxu0
    %v1831 = vpop.f32.mrb[0].mxu0
    %1832 = vdwg.mxu0
    %1833 = vmatprep.subr.bf16.mxu0 0
    %1834 = vmatpush1.bf16.msra.mxu0 %v1401
    %1835 = vmatprep.subr.bf16.mxu0 0
    %1836 = vmatpush1.bf16.msra.mxu0 %v1402
    %1837 = vmatprep.subr.bf16.mxu0 0
    %1838 = vmatpush1.bf16.msra.mxu0 %v1403
    %1839 = vmatprep.subr.bf16.mxu0 0
    %1840 = vmatpush1.bf16.msra.mxu0 %v1404
    %1841 = vmatprep.subr.bf16.mxu0 0
    %1842 = vmatpush1.bf16.msra.mxu0 %v1405
    %1843 = vmatprep.subr.bf16.mxu0 0
    %1844 = vmatpush1.bf16.msra.mxu0 %v1406
    %1845 = vmatprep.subr.bf16.mxu0 0
    %1846 = vmatpush1.bf16.msra.mxu0 %v1407
    %1847 = vmatprep.subr.bf16.mxu0 0
    %1848 = vmatpush1.bf16.msra.mxu0 %v1408
    %1849 = vmatprep.subr.bf16.mxu0 0
    %1850 = vmatpush1.bf16.msra.mxu0 %v1409
    %1851 = vmatprep.subr.bf16.mxu0 0
    %1852 = vmatpush1.bf16.msra.mxu0 %v1410
    %1853 = vmatprep.subr.bf16.mxu0 0
    %1854 = vmatpush1.bf16.msra.mxu0 %v1411
    %1855 = vmatprep.subr.bf16.mxu0 0
    %1856 = vmatpush1.bf16.msra.mxu0 %v1412
    %1857 = vmatprep.subr.bf16.mxu0 0
    %1858 = vmatpush1.bf16.msra.mxu0 %v1413
    %1859 = vmatprep.subr.bf16.mxu0 0
    %1860 = vmatpush1.bf16.msra.mxu0 %v1414
    %1861 = vmatprep.subr.bf16.mxu0 0
    %1862 = vmatpush1.bf16.msra.mxu0 %v1415
    %1863 = vmatprep.subr.bf16.mxu0 0
    %1864 = vmatpush1.bf16.msra.mxu0 %v1416
    %1865 = vmatprep.mubr.bf16.mxu0 %v558
    %1866 = vmatmul.mubr.bf16.gmra.mrb[0].mxu0 %v557
    %v1867 = vpop.f32.mrb[0].mxu0
    %v1868 = vadd.f32 %v1828, %v1867
    %v1869 = vpop.f32.mrb[0].mxu0
    %v1870 = vpop.f32.mrb[0].mxu0
    %v1871 = vpop.f32.mrb[0].mxu0
    %1872 = vdwg.mxu0
    %1873 = vmatprep.subr.bf16.mxu0 0
    %1874 = vmatpush1.bf16.msra.mxu0 %v1417
    %1875 = vmatprep.subr.bf16.mxu0 0
    %1876 = vmatpush1.bf16.msra.mxu0 %v1418
    %1877 = vmatprep.subr.bf16.mxu0 0
    %1878 = vmatpush1.bf16.msra.mxu0 %v1419
    %1879 = vmatprep.subr.bf16.mxu0 0
    %1880 = vmatpush1.bf16.msra.mxu0 %v1420
    %1881 = vmatprep.subr.bf16.mxu0 0
    %1882 = vmatpush1.bf16.msra.mxu0 %v1421
    %1883 = vmatprep.subr.bf16.mxu0 0
    %1884 = vmatpush1.bf16.msra.mxu0 %v1422
    %1885 = vmatprep.subr.bf16.mxu0 0
    %1886 = vmatpush1.bf16.msra.mxu0 %v1423
    %1887 = vmatprep.subr.bf16.mxu0 0
    %1888 = vmatpush1.bf16.msra.mxu0 %v1424
    %1889 = vmatprep.subr.bf16.mxu0 0
    %1890 = vmatpush1.bf16.msra.mxu0 %v1425
    %1891 = vmatprep.subr.bf16.mxu0 0
    %1892 = vmatpush1.bf16.msra.mxu0 %v1426
    %1893 = vmatprep.subr.bf16.mxu0 0
    %1894 = vmatpush1.bf16.msra.mxu0 %v1427
    %1895 = vmatprep.subr.bf16.mxu0 0
    %1896 = vmatpush1.bf16.msra.mxu0 %v1428
    %1897 = vmatprep.subr.bf16.mxu0 0
    %1898 = vmatpush1.bf16.msra.mxu0 %v1429
    %1899 = vmatprep.subr.bf16.mxu0 0
    %1900 = vmatpush1.bf16.msra.mxu0 %v1430
    %1901 = vmatprep.subr.bf16.mxu0 0
    %1902 = vmatpush1.bf16.msra.mxu0 %v1431
    %1903 = vmatprep.subr.bf16.mxu0 0
    %1904 = vmatpush1.bf16.msra.mxu0 %v1432
    %1905 = vmatprep.mubr.bf16.mxu0 %v560
    %1906 = vmatmul.mubr.bf16.gmra.mrb[0].mxu0 %v559
    %v1907 = vpop.f32.mrb[0].mxu0
    %v1908 = vadd.f32 %v1868, %v1907
    %v1909 = vpop.f32.mrb[0].mxu0
    %v1910 = vpop.f32.mrb[0].mxu0
    %v1911 = vpop.f32.mrb[0].mxu0
    %1912 = vdwg.mxu0
    %1913 = vmatprep.subr.bf16.mxu0 0
    %1914 = vmatpush1.bf16.msra.mxu0 %v1433
    %1915 = vmatprep.subr.bf16.mxu0 0
    %1916 = vmatpush1.bf16.msra.mxu0 %v1434
    %1917 = vmatprep.subr.bf16.mxu0 0
    %1918 = vmatpush1.bf16.msra.mxu0 %v1435
    %1919 = vmatprep.subr.bf16.mxu0 0
    %1920 = vmatpush1.bf16.msra.mxu0 %v1436
    %1921 = vmatprep.subr.bf16.mxu0 0
    %1922 = vmatpush1.bf16.msra.mxu0 %v1437
    %1923 = vmatprep.subr.bf16.mxu0 0
    %1924 = vmatpush1.bf16.msra.mxu0 %v1438
    %1925 = vmatprep.subr.bf16.mxu0 0
    %1926 = vmatpush1.bf16.msra.mxu0 %v1439
    %1927 = vmatprep.subr.bf16.mxu0 0
    %1928 = vmatpush1.bf16.msra.mxu0 %v1440
    %1929 = vmatprep.subr.bf16.mxu0 0
    %1930 = vmatpush1.bf16.msra.mxu0 %v1441
    %1931 = vmatprep.subr.bf16.mxu0 0
    %1932 = vmatpush1.bf16.msra.mxu0 %v1442
    %1933 = vmatprep.subr.bf16.mxu0 0
    %1934 = vmatpush1.bf16.msra.mxu0 %v1443
    %1935 = vmatprep.subr.bf16.mxu0 0
    %1936 = vmatpush1.bf16.msra.mxu0 %v1444
    %1937 = vmatprep.subr.bf16.mxu0 0
    %1938 = vmatpush1.bf16.msra.mxu0 %v1445
    %1939 = vmatprep.subr.bf16.mxu0 0
    %1940 = vmatpush1.bf16.msra.mxu0 %v1446
    %1941 = vmatprep.subr.bf16.mxu0 0
    %1942 = vmatpush1.bf16.msra.mxu0 %v1447
    %1943 = vmatprep.subr.bf16.mxu0 0
    %1944 = vmatpush1.bf16.msra.mxu0 %v1448
    %1945 = vmatprep.mubr.bf16.mxu0 %v562
    %1946 = vmatmul.mubr.bf16.gmra.mrb[0].mxu0 %v561
    %v1947 = vpop.f32.mrb[0].mxu0
    %v1948 = vadd.f32 %v1908, %v1947
    %v1949 = vpop.f32.mrb[0].mxu0
    %v1950 = vpop.f32.mrb[0].mxu0
    %v1951 = vpop.f32.mrb[0].mxu0
    %1952 = vdwg.mxu0
    %1953 = vmatprep.subr.bf16.mxu0 0
    %1954 = vmatpush1.bf16.msra.mxu0 %v1449
    %1955 = vmatprep.subr.bf16.mxu0 0
    %1956 = vmatpush1.bf16.msra.mxu0 %v1450
    %1957 = vmatprep.subr.bf16.mxu0 0
    %1958 = vmatpush1.bf16.msra.mxu0 %v1451
    %1959 = vmatprep.subr.bf16.mxu0 0
    %1960 = vmatpush1.bf16.msra.mxu0 %v1452
    %1961 = vmatprep.subr.bf16.mxu0 0
    %1962 = vmatpush1.bf16.msra.mxu0 %v1453
    %1963 = vmatprep.subr.bf16.mxu0 0
    %1964 = vmatpush1.bf16.msra.mxu0 %v1454
    %1965 = vmatprep.subr.bf16.mxu0 0
    %1966 = vmatpush1.bf16.msra.mxu0 %v1455
    %1967 = vmatprep.subr.bf16.mxu0 0
    %1968 = vmatpush1.bf16.msra.mxu0 %v1456
    %1969 = vmatprep.subr.bf16.mxu0 0
    %1970 = vmatpush1.bf16.msra.mxu0 %v1457
    %1971 = vmatprep.subr.bf16.mxu0 0
    %1972 = vmatpush1.bf16.msra.mxu0 %v1458
    %1973 = vmatprep.subr.bf16.mxu0 0
    %1974 = vmatpush1.bf16.msra.mxu0 %v1459
    %1975 = vmatprep.subr.bf16.mxu0 0
    %1976 = vmatpush1.bf16.msra.mxu0 %v1460
    %1977 = vmatprep.subr.bf16.mxu0 0
    %1978 = vmatpush1.bf16.msra.mxu0 %v1461
    %1979 = vmatprep.subr.bf16.mxu0 0
    %1980 = vmatpush1.bf16.msra.mxu0 %v1462
    %1981 = vmatprep.subr.bf16.mxu0 0
    %1982 = vmatpush1.bf16.msra.mxu0 %v1463
    %1983 = vmatprep.subr.bf16.mxu0 0
    %1984 = vmatpush1.bf16.msra.mxu0 %v1464
    %1985 = vmatprep.mubr.bf16.mxu0 %v564
    %1986 = vmatmul.mubr.bf16.gmra.mrb[0].mxu0 %v563
    %v1987 = vpop.f32.mrb[0].mxu0
    %v1988 = vadd.f32 %v1948, %v1987
    %v1989 = vpop.f32.mrb[0].mxu0
    %v1990 = vpop.f32.mrb[0].mxu0
    %v1991 = vpop.f32.mrb[0].mxu0
    %1992 = vdwg.mxu0
    %1993 = vmatprep.subr.bf16.mxu0 0
    %1994 = vmatpush1.bf16.msra.mxu0 %v1465
    %1995 = vmatprep.subr.bf16.mxu0 0
    %1996 = vmatpush1.bf16.msra.mxu0 %v1466
    %1997 = vmatprep.subr.bf16.mxu0 0
    %1998 = vmatpush1.bf16.msra.mxu0 %v1467
    %1999 = vmatprep.subr.bf16.mxu0 0
    %2000 = vmatpush1.bf16.msra.mxu0 %v1468
    %2001 = vmatprep.subr.bf16.mxu0 0
    %2002 = vmatpush1.bf16.msra.mxu0 %v1469
    %2003 = vmatprep.subr.bf16.mxu0 0
    %2004 = vmatpush1.bf16.msra.mxu0 %v1470
    %2005 = vmatprep.subr.bf16.mxu0 0
    %2006 = vmatpush1.bf16.msra.mxu0 %v1471
    %2007 = vmatprep.subr.bf16.mxu0 0
    %2008 = vmatpush1.bf16.msra.mxu0 %v1472
    %2009 = vmatprep.subr.bf16.mxu0 0
    %2010 = vmatpush1.bf16.msra.mxu0 %v1473
    %2011 = vmatprep.subr.bf16.mxu0 0
    %2012 = vmatpush1.bf16.msra.mxu0 %v1474
    %2013 = vmatprep.subr.bf16.mxu0 0
    %2014 = vmatpush1.bf16.msra.mxu0 %v1475
    %2015 = vmatprep.subr.bf16.mxu0 0
    %2016 = vmatpush1.bf16.msra.mxu0 %v1476
    %2017 = vmatprep.subr.bf16.mxu0 0
    %2018 = vmatpush1.bf16.msra.mxu0 %v1477
    %2019 = vmatprep.subr.bf16.mxu0 0
    %2020 = vmatpush1.bf16.msra.mxu0 %v1478
    %2021 = vmatprep.subr.bf16.mxu0 0
    %2022 = vmatpush1.bf16.msra.mxu0 %v1479
    %2023 = vmatprep.subr.bf16.mxu0 0
    %2024 = vmatpush1.bf16.msra.mxu0 %v1480
    %2025 = vmatprep.mubr.bf16.mxu0 %v566
    %2026 = vmatmul.mubr.bf16.gmra.mrb[0].mxu0 %v565
    %v2027 = vpop.f32.mrb[0].mxu0
    %v2028 = vadd.f32 %v1988, %v2027
    %v2029 = vpop.f32.mrb[0].mxu0
    %v2030 = vpop.f32.mrb[0].mxu0
    %v2031 = vpop.f32.mrb[0].mxu0
    %2032 = vdwg.mxu0
    %2033 = vmatprep.subr.bf16.mxu0 0
    %2034 = vmatpush1.bf16.msra.mxu0 %v1481
    %2035 = vmatprep.subr.bf16.mxu0 0
    %2036 = vmatpush1.bf16.msra.mxu0 %v1482
    %2037 = vmatprep.subr.bf16.mxu0 0
    %2038 = vmatpush1.bf16.msra.mxu0 %v1483
    %2039 = vmatprep.subr.bf16.mxu0 0
    %2040 = vmatpush1.bf16.msra.mxu0 %v1484
    %2041 = vmatprep.subr.bf16.mxu0 0
    %2042 = vmatpush1.bf16.msra.mxu0 %v1485
    %2043 = vmatprep.subr.bf16.mxu0 0
    %2044 = vmatpush1.bf16.msra.mxu0 %v1486
    %2045 = vmatprep.subr.bf16.mxu0 0
    %2046 = vmatpush1.bf16.msra.mxu0 %v1487
    %2047 = vmatprep.subr.bf16.mxu0 0
    %2048 = vmatpush1.bf16.msra.mxu0 %v1488
    %2049 = vmatprep.subr.bf16.mxu0 0
    %2050 = vmatpush1.bf16.msra.mxu0 %v1489
    %2051 = vmatprep.subr.bf16.mxu0 0
    %2052 = vmatpush1.bf16.msra.mxu0 %v1490
    %2053 = vmatprep.subr.bf16.mxu0 0
    %2054 = vmatpush1.bf16.msra.mxu0 %v1491
    %2055 = vmatprep.subr.bf16.mxu0 0
    %2056 = vmatpush1.bf16.msra.mxu0 %v1492
    %2057 = vmatprep.subr.bf16.mxu0 0
    %2058 = vmatpush1.bf16.msra.mxu0 %v1493
    %2059 = vmatprep.subr.bf16.mxu0 0
    %2060 = vmatpush1.bf16.msra.mxu0 %v1494
    %2061 = vmatprep.subr.bf16.mxu0 0
    %2062 = vmatpush1.bf16.msra.mxu0 %v1495
    %2063 = vmatprep.subr.bf16.mxu0 0
    %2064 = vmatpush1.bf16.msra.mxu0 %v1496
    %2065 = vmatprep.mubr.bf16.mxu0 %v568
    %2066 = vmatmul.mubr.bf16.gmra.mrb[0].mxu0 %v567
    %v2067 = vpop.f32.mrb[0].mxu0
    %v2068 = vadd.f32 %v2028, %v2067
    %v2069 = vpop.f32.mrb[0].mxu0
    %v2070 = vpop.f32.mrb[0].mxu0
    %v2071 = vpop.f32.mrb[0].mxu0
    %2072 = vdwg.mxu0
    %2073 = vmatprep.subr.bf16.mxu0 0
    %2074 = vmatpush1.bf16.msra.mxu0 %v1497
    %2075 = vmatprep.subr.bf16.mxu0 0
    %2076 = vmatpush1.bf16.msra.mxu0 %v1498
    %2077 = vmatprep.subr.bf16.mxu0 0
    %2078 = vmatpush1.bf16.msra.mxu0 %v1499
    %2079 = vmatprep.subr.bf16.mxu0 0
    %2080 = vmatpush1.bf16.msra.mxu0 %v1500
    %2081 = vmatprep.subr.bf16.mxu0 0
    %2082 = vmatpush1.bf16.msra.mxu0 %v1501
    %2083 = vmatprep.subr.bf16.mxu0 0
    %2084 = vmatpush1.bf16.msra.mxu0 %v1502
    %2085 = vmatprep.subr.bf16.mxu0 0
    %2086 = vmatpush1.bf16.msra.mxu0 %v1503
    %2087 = vmatprep.subr.bf16.mxu0 0
    %2088 = vmatpush1.bf16.msra.mxu0 %v1504
    %2089 = vmatprep.subr.bf16.mxu0 0
    %2090 = vmatpush1.bf16.msra.mxu0 %v1505
    %2091 = vmatprep.subr.bf16.mxu0 0
    %2092 = vmatpush1.bf16.msra.mxu0 %v1506
    %2093 = vmatprep.subr.bf16.mxu0 0
    %2094 = vmatpush1.bf16.msra.mxu0 %v1507
    %2095 = vmatprep.subr.bf16.mxu0 0
    %2096 = vmatpush1.bf16.msra.mxu0 %v1508
    %2097 = vmatprep.subr.bf16.mxu0 0
    %2098 = vmatpush1.bf16.msra.mxu0 %v1509
    %2099 = vmatprep.subr.bf16.mxu0 0
    %2100 = vmatpush1.bf16.msra.mxu0 %v1510
    %2101 = vmatprep.subr.bf16.mxu0 0
    %2102 = vmatpush1.bf16.msra.mxu0 %v1511
    %2103 = vmatprep.subr.bf16.mxu0 0
    %2104 = vmatpush1.bf16.msra.mxu0 %v1512
    %2105 = vmatprep.mubr.bf16.mxu0 %v570
    %2106 = vmatmul.mubr.bf16.gmra.mrb[0].mxu0 %v569
    %v2107 = vpop.f32.mrb[0].mxu0
    %v2108 = vadd.f32 %v2068, %v2107
    %v2109 = vpop.f32.mrb[0].mxu0
    %v2110 = vpop.f32.mrb[0].mxu0
    %v2111 = vpop.f32.mrb[0].mxu0
    %2112 = vdwg.mxu0
    %2113 = vmatprep.subr.bf16.mxu0 0
    %2114 = vmatpush1.bf16.msra.mxu0 %v1513
    %2115 = vmatprep.subr.bf16.mxu0 0
    %2116 = vmatpush1.bf16.msra.mxu0 %v1514
    %2117 = vmatprep.subr.bf16.mxu0 0
    %2118 = vmatpush1.bf16.msra.mxu0 %v1515
    %2119 = vmatprep.subr.bf16.mxu0 0
    %2120 = vmatpush1.bf16.msra.mxu0 %v1516
    %2121 = vmatprep.subr.bf16.mxu0 0
    %2122 = vmatpush1.bf16.msra.mxu0 %v1517
    %2123 = vmatprep.subr.bf16.mxu0 0
    %2124 = vmatpush1.bf16.msra.mxu0 %v1518
    %2125 = vmatprep.subr.bf16.mxu0 0
    %2126 = vmatpush1.bf16.msra.mxu0 %v1519
    %2127 = vmatprep.subr.bf16.mxu0 0
    %2128 = vmatpush1.bf16.msra.mxu0 %v1520
    %2129 = vmatprep.subr.bf16.mxu0 0
    %2130 = vmatpush1.bf16.msra.mxu0 %v1521
    %2131 = vmatprep.subr.bf16.mxu0 0
    %2132 = vmatpush1.bf16.msra.mxu0 %v1522
    %2133 = vmatprep.subr.bf16.mxu0 0
    %2134 = vmatpush1.bf16.msra.mxu0 %v1523
    %2135 = vmatprep.subr.bf16.mxu0 0
    %2136 = vmatpush1.bf16.msra.mxu0 %v1524
    %2137 = vmatprep.subr.bf16.mxu0 0
    %2138 = vmatpush1.bf16.msra.mxu0 %v1525
    %2139 = vmatprep.subr.bf16.mxu0 0
    %2140 = vmatpush1.bf16.msra.mxu0 %v1526
    %2141 = vmatprep.subr.bf16.mxu0 0
    %2142 = vmatpush1.bf16.msra.mxu0 %v1527
    %2143 = vmatprep.subr.bf16.mxu0 0
    %2144 = vmatpush1.bf16.msra.mxu0 %v1528
    %2145 = vmatprep.mubr.bf16.mxu0 %v572
    %2146 = vmatmul.mubr.bf16.gmra.mrb[0].mxu0 %v571
    %v2147 = vpop.f32.mrb[0].mxu0
    %v2148 = vadd.f32 %v2108, %v2147
    %v2149 = vpop.f32.mrb[0].mxu0
    %v2150 = vpop.f32.mrb[0].mxu0
    %v2151 = vpop.f32.mrb[0].mxu0
    %2152 = vdwg.mxu0
    %2153 = vmatprep.subr.bf16.mxu0 0
    %2154 = vmatpush1.bf16.msra.mxu0 %v1529
    %2155 = vmatprep.subr.bf16.mxu0 0
    %2156 = vmatpush1.bf16.msra.mxu0 %v1530
    %2157 = vmatprep.subr.bf16.mxu0 0
    %2158 = vmatpush1.bf16.msra.mxu0 %v1531
    %2159 = vmatprep.subr.bf16.mxu0 0
    %2160 = vmatpush1.bf16.msra.mxu0 %v1532
    %2161 = vmatprep.subr.bf16.mxu0 0
    %2162 = vmatpush1.bf16.msra.mxu0 %v1533
    %2163 = vmatprep.subr.bf16.mxu0 0
    %2164 = vmatpush1.bf16.msra.mxu0 %v1534
    %2165 = vmatprep.subr.bf16.mxu0 0
    %2166 = vmatpush1.bf16.msra.mxu0 %v1535
    %2167 = vmatprep.subr.bf16.mxu0 0
    %2168 = vmatpush1.bf16.msra.mxu0 %v1536
    %2169 = vmatprep.subr.bf16.mxu0 0
    %2170 = vmatpush1.bf16.msra.mxu0 %v1537
    %2171 = vmatprep.subr.bf16.mxu0 0
    %2172 = vmatpush1.bf16.msra.mxu0 %v1538
    %2173 = vmatprep.subr.bf16.mxu0 0
    %2174 = vmatpush1.bf16.msra.mxu0 %v1539
    %2175 = vmatprep.subr.bf16.mxu0 0
    %2176 = vmatpush1.bf16.msra.mxu0 %v1540
    %2177 = vmatprep.subr.bf16.mxu0 0
    %2178 = vmatpush1.bf16.msra.mxu0 %v1541
    %2179 = vmatprep.subr.bf16.mxu0 0
    %2180 = vmatpush1.bf16.msra.mxu0 %v1542
    %2181 = vmatprep.subr.bf16.mxu0 0
    %2182 = vmatpush1.bf16.msra.mxu0 %v1543
    %2183 = vmatprep.subr.bf16.mxu0 0
    %2184 = vmatpush1.bf16.msra.mxu0 %v1544
    %2185 = vmatprep.mubr.bf16.mxu0 %v574
    %2186 = vmatmul.mubr.bf16.gmra.mrb[0].mxu0 %v573
    %v2187 = vpop.f32.mrb[0].mxu0
    %v2188 = vadd.f32 %v2148, %v2187
    %v2189 = vpop.f32.mrb[0].mxu0
    %v2190 = vpop.f32.mrb[0].mxu0
    %v2191 = vpop.f32.mrb[0].mxu0
    %2192 = vdwg.mxu0
    %2193 = vmatprep.subr.bf16.mxu0 0
    %2194 = vmatpush1.bf16.msra.mxu0 %v1545
    %2195 = vmatprep.subr.bf16.mxu0 0
    %2196 = vmatpush1.bf16.msra.mxu0 %v1546
    %2197 = vmatprep.subr.bf16.mxu0 0
    %2198 = vmatpush1.bf16.msra.mxu0 %v1547
    %2199 = vmatprep.subr.bf16.mxu0 0
    %2200 = vmatpush1.bf16.msra.mxu0 %v1548
    %2201 = vmatprep.subr.bf16.mxu0 0
    %2202 = vmatpush1.bf16.msra.mxu0 %v1549
    %2203 = vmatprep.subr.bf16.mxu0 0
    %2204 = vmatpush1.bf16.msra.mxu0 %v1550
    %2205 = vmatprep.subr.bf16.mxu0 0
    %2206 = vmatpush1.bf16.msra.mxu0 %v1551
    %2207 = vmatprep.subr.bf16.mxu0 0
    %2208 = vmatpush1.bf16.msra.mxu0 %v1552
    %2209 = vmatprep.subr.bf16.mxu0 0
    %2210 = vmatpush1.bf16.msra.mxu0 %v1553
    %2211 = vmatprep.subr.bf16.mxu0 0
    %2212 = vmatpush1.bf16.msra.mxu0 %v1554
    %2213 = vmatprep.subr.bf16.mxu0 0
    %2214 = vmatpush1.bf16.msra.mxu0 %v1555
    %2215 = vmatprep.subr.bf16.mxu0 0
    %2216 = vmatpush1.bf16.msra.mxu0 %v1556
    %2217 = vmatprep.subr.bf16.mxu0 0
    %2218 = vmatpush1.bf16.msra.mxu0 %v1557
    %2219 = vmatprep.subr.bf16.mxu0 0
    %2220 = vmatpush1.bf16.msra.mxu0 %v1558
    %2221 = vmatprep.subr.bf16.mxu0 0
    %2222 = vmatpush1.bf16.msra.mxu0 %v1559
    %2223 = vmatprep.subr.bf16.mxu0 0
    %2224 = vmatpush1.bf16.msra.mxu0 %v1560
    %2225 = vmatprep.mubr.bf16.mxu0 %v576
    %2226 = vmatmul.mubr.bf16.gmra.mrb[0].mxu0 %v575
    %v2227 = vpop.f32.mrb[0].mxu0
    %v2228 = vadd.f32 %v2188, %v2227
    %v2229 = vpop.f32.mrb[0].mxu0
    %v2230 = vpop.f32.mrb[0].mxu0
    %v2231 = vpop.f32.mrb[0].mxu0
    %2232 = vdwg.mxu0
    %v2233 = vmax.f32 %v2228, 0.0
    %v2234 = vpack.c.bf16 %v2233, %v2233
    %v2235 = vld [vmem:[#allocation7] sm:$0xf]
    %v2236 = vld [vmem:[#allocation7 + $0x4] sm:$0xf]
    %v2237 = vld [vmem:[#allocation7 + $0x8] sm:$0xf]
    %v2238 = vld [vmem:[#allocation7 + $0xc] sm:$0xf]
    %v2239 = vld [vmem:[#allocation7 + $0x10] sm:$0xf]
    %v2240 = vld [vmem:[#allocation7 + $0x14] sm:$0xf]
    %v2241 = vld [vmem:[#allocation7 + $0x18] sm:$0xf]
    %v2242 = vld [vmem:[#allocation7 + $0x1c] sm:$0xf]
    %v2243 = vld [vmem:[#allocation7 + $0x20] sm:$0xf]
    %v2244 = vld [vmem:[#allocation7 + $0x24] sm:$0xf]
    %v2245 = vld [vmem:[#allocation7 + $0x28] sm:$0xf]
    %v2246 = vld [vmem:[#allocation7 + $0x2c] sm:$0xf]
    %v2247 = vld [vmem:[#allocation7 + $0x30] sm:$0xf]
    %v2248 = vld [vmem:[#allocation7 + $0x34] sm:$0xf]
    %v2249 = vld [vmem:[#allocation7 + $0x38] sm:$0xf]
    %v2250 = vld [vmem:[#allocation7 + $0x3c] sm:$0xf]
    %v2267 = vunpack.c.l.b16 %v2235
    %v2268 = vunpack.c.l.b16 %v2236
    %v2269 = vunpack.c.l.b16 %v2237
    %v2270 = vunpack.c.l.b16 %v2238
    %v2271 = vunpack.c.l.b16 %v2239
    %v2272 = vunpack.c.l.b16 %v2240
    %v2273 = vunpack.c.l.b16 %v2241
    %v2274 = vunpack.c.l.b16 %v2242
    %v2275 = vunpack.c.l.b16 %v2243
    %v2276 = vunpack.c.l.b16 %v2244
    %v2277 = vunpack.c.l.b16 %v2245
    %v2278 = vunpack.c.l.b16 %v2246
    %v2279 = vunpack.c.l.b16 %v2247
    %v2280 = vunpack.c.l.b16 %v2248
    %v2281 = vunpack.c.l.b16 %v2249
    %v2282 = vunpack.c.l.b16 %v2250
    %v2283 = vpack.c.b16 %v2268, %v2267
    %v2284 = vpack.c.b16 %v2270, %v2269
    %v2285 = vpack.c.b16 %v2272, %v2271
    %v2286 = vpack.c.b16 %v2274, %v2273
    %v2287 = vpack.c.b16 %v2276, %v2275
    %v2288 = vpack.c.b16 %v2278, %v2277
    %v2289 = vpack.c.b16 %v2280, %v2279
    %v2290 = vpack.c.b16 %v2282, %v2281
    %2299 = vmatprep.subr.bf16.mxu0 0
    %2300 = vmatpush1.bf16.msra.mxu0 %v2283
    %2301 = vmatprep.subr.bf16.mxu0 0
    %2302 = vmatpush1.bf16.msra.mxu0 %v2284
    %2303 = vmatprep.subr.bf16.mxu0 0
    %2304 = vmatpush1.bf16.msra.mxu0 %v2285
    %2305 = vmatprep.subr.bf16.mxu0 0
    %2306 = vmatpush1.bf16.msra.mxu0 %v2286
    %2307 = vmatprep.subr.bf16.mxu0 0
    %2308 = vmatpush1.bf16.msra.mxu0 %v2287
    %2309 = vmatprep.subr.bf16.mxu0 0
    %2310 = vmatpush1.bf16.msra.mxu0 %v2288
    %2311 = vmatprep.subr.bf16.mxu0 0
    %2312 = vmatpush1.bf16.msra.mxu0 %v2289
    %2313 = vmatprep.subr.bf16.mxu0 0
    %2314 = vmatpush1.bf16.msra.mxu0 %v2290
    %2315 = vmatprep.subr.bf16.mxu0 0
    %2316 = vmatpush1.bf16.msra.mxu0 0
    %2317 = vmatprep.subr.bf16.mxu0 0
    %2318 = vmatpush1.bf16.msra.mxu0 0
    %2319 = vmatprep.subr.bf16.mxu0 0
    %2320 = vmatpush1.bf16.msra.mxu0 0
    %2321 = vmatprep.subr.bf16.mxu0 0
    %2322 = vmatpush1.bf16.msra.mxu0 0
    %2323 = vmatprep.subr.bf16.mxu0 0
    %2324 = vmatpush1.bf16.msra.mxu0 0
    %2325 = vmatprep.subr.bf16.mxu0 0
    %2326 = vmatpush1.bf16.msra.mxu0 0
    %2327 = vmatprep.subr.bf16.mxu0 0
    %2328 = vmatpush1.bf16.msra.mxu0 0
    %2329 = vmatprep.subr.bf16.mxu0 0
    %2330 = vmatpush1.bf16.msra.mxu0 0
    %2331 = vmatprep.mubr.bf16.mxu0 0
    %2332 = vmatmul.mubr.bf16.gmra.mrb[0].mxu0 %v2234
    %v2333 = vpop.f32.mrb[0].mxu0
    %v2334 = vadd.f32 0.0, %v2333
    %v2335 = vpop.f32.mrb[0].mxu0
    %v2336 = vpop.f32.mrb[0].mxu0
    %v2337 = vpop.f32.mrb[0].mxu0
    %2338 = vdwg.mxu0
    %v2339 = vmax.f32 %v2334, 0.0
    %v2340 = vpack.c.bf16 %v2339, %v2339
    %v2341 = vld [vmem:[#allocation8] sm:$0xf]
    %v2342 = vld [vmem:[#allocation8 + $0x4] sm:$0xf]
    %v2343 = vld [vmem:[#allocation8 + $0x8] sm:$0xf]
    %v2344 = vld [vmem:[#allocation8 + $0xc] sm:$0xf]
    %v2345 = vld [vmem:[#allocation8 + $0x10] sm:$0xf]
    %v2346 = vld [vmem:[#allocation8 + $0x14] sm:$0xf]
    %v2347 = vld [vmem:[#allocation8 + $0x18] sm:$0xf]
    %v2348 = vld [vmem:[#allocation8 + $0x1c] sm:$0xf]
    %v2349 = vld [vmem:[#allocation8 + $0x20] sm:$0xf]
    %v2350 = vld [vmem:[#allocation8 + $0x24] sm:$0xf]
    %v2351 = vld [vmem:[#allocation8 + $0x28] sm:$0xf]
    %v2352 = vld [vmem:[#allocation8 + $0x2c] sm:$0xf]
    %v2353 = vld [vmem:[#allocation8 + $0x30] sm:$0xf]
    %v2354 = vld [vmem:[#allocation8 + $0x34] sm:$0xf]
    %v2355 = vld [vmem:[#allocation8 + $0x38] sm:$0xf]
    %v2356 = vld [vmem:[#allocation8 + $0x3c] sm:$0xf]
    %v2373 = vunpack.c.l.b16 %v2341
    %v2374 = vunpack.c.l.b16 %v2342
    %v2375 = vunpack.c.l.b16 %v2343
    %v2376 = vunpack.c.l.b16 %v2344
    %v2377 = vunpack.c.l.b16 %v2345
    %v2378 = vunpack.c.l.b16 %v2346
    %v2379 = vunpack.c.l.b16 %v2347
    %v2380 = vunpack.c.l.b16 %v2348
    %v2381 = vunpack.c.l.b16 %v2349
    %v2382 = vunpack.c.l.b16 %v2350
    %v2383 = vunpack.c.l.b16 %v2351
    %v2384 = vunpack.c.l.b16 %v2352
    %v2385 = vunpack.c.l.b16 %v2353
    %v2386 = vunpack.c.l.b16 %v2354
    %v2387 = vunpack.c.l.b16 %v2355
    %v2388 = vunpack.c.l.b16 %v2356
    %v2389 = vpack.c.b16 %v2374, %v2373
    %v2390 = vpack.c.b16 %v2376, %v2375
    %v2391 = vpack.c.b16 %v2378, %v2377
    %v2392 = vpack.c.b16 %v2380, %v2379
    %v2393 = vpack.c.b16 %v2382, %v2381
    %v2394 = vpack.c.b16 %v2384, %v2383
    %v2395 = vpack.c.b16 %v2386, %v2385
    %v2396 = vpack.c.b16 %v2388, %v2387
    %2405 = vmatprep.subr.bf16.mxu0 0
    %2406 = vmatpush1.bf16.msra.mxu0 %v2389
    %2407 = vmatprep.subr.bf16.mxu0 0
    %2408 = vmatpush1.bf16.msra.mxu0 %v2390
    %2409 = vmatprep.subr.bf16.mxu0 0
    %2410 = vmatpush1.bf16.msra.mxu0 %v2391
    %2411 = vmatprep.subr.bf16.mxu0 0
    %2412 = vmatpush1.bf16.msra.mxu0 %v2392
    %2413 = vmatprep.subr.bf16.mxu0 0
    %2414 = vmatpush1.bf16.msra.mxu0 %v2393
    %2415 = vmatprep.subr.bf16.mxu0 0
    %2416 = vmatpush1.bf16.msra.mxu0 %v2394
    %2417 = vmatprep.subr.bf16.mxu0 0
    %2418 = vmatpush1.bf16.msra.mxu0 %v2395
    %2419 = vmatprep.subr.bf16.mxu0 0
    %2420 = vmatpush1.bf16.msra.mxu0 %v2396
    %2421 = vmatprep.subr.bf16.mxu0 0
    %2422 = vmatpush1.bf16.msra.mxu0 0
    %2423 = vmatprep.subr.bf16.mxu0 0
    %2424 = vmatpush1.bf16.msra.mxu0 0
    %2425 = vmatprep.subr.bf16.mxu0 0
    %2426 = vmatpush1.bf16.msra.mxu0 0
    %2427 = vmatprep.subr.bf16.mxu0 0
    %2428 = vmatpush1.bf16.msra.mxu0 0
    %2429 = vmatprep.subr.bf16.mxu0 0
    %2430 = vmatpush1.bf16.msra.mxu0 0
    %2431 = vmatprep.subr.bf16.mxu0 0
    %2432 = vmatpush1.bf16.msra.mxu0 0
    %2433 = vmatprep.subr.bf16.mxu0 0
    %2434 = vmatpush1.bf16.msra.mxu0 0
    %2435 = vmatprep.subr.bf16.mxu0 0
    %2436 = vmatpush1.bf16.msra.mxu0 0
    %2437 = vmatprep.mubr.bf16.mxu0 0
    %2438 = vmatmul.mubr.bf16.gmra.mrb[0].mxu0 %v2340
    %v2439 = vpop.f32.mrb[0].mxu0
    %v2440 = vadd.f32 0.0, %v2439
    %v2441 = vpop.f32.mrb[0].mxu0
    %v2442 = vpop.f32.mrb[0].mxu0
    %v2443 = vpop.f32.mrb[0].mxu0
    %2444 = vdwg.mxu0
    %v2445 = vmax.f32 %v2440, 0.0
    %v2446 = vpack.c.bf16 %v2445, %v2445
    %v2447 = vld [vmem:[#allocation10] sm:$0xf]
    %v2448 = vld [vmem:[#allocation10 + $0x4] sm:$0xf]
    %v2449 = vld [vmem:[#allocation10 + $0x8] sm:$0xf]
    %v2450 = vld [vmem:[#allocation10 + $0xc] sm:$0xf]
    %v2451 = vld [vmem:[#allocation10 + $0x10] sm:$0xf]
    %v2452 = vld [vmem:[#allocation10 + $0x14] sm:$0xf]
    %v2453 = vld [vmem:[#allocation10 + $0x18] sm:$0xf]
    %v2454 = vld [vmem:[#allocation10 + $0x1c] sm:$0xf]
    %v2455 = vld [vmem:[#allocation10 + $0x20] sm:$0xf]
    %v2456 = vld [vmem:[#allocation10 + $0x24] sm:$0xf]
    %v2457 = vld [vmem:[#allocation10 + $0x28] sm:$0xf]
    %v2458 = vld [vmem:[#allocation10 + $0x2c] sm:$0xf]
    %v2459 = vld [vmem:[#allocation10 + $0x30] sm:$0xf]
    %v2460 = vld [vmem:[#allocation10 + $0x34] sm:$0xf]
    %v2461 = vld [vmem:[#allocation10 + $0x38] sm:$0xf]
    %v2462 = vld [vmem:[#allocation10 + $0x3c] sm:$0xf]
    %v2479 = vunpack.c.l.b16 %v2447
    %v2480 = vunpack.c.l.b16 %v2448
    %v2481 = vunpack.c.l.b16 %v2449
    %v2482 = vunpack.c.l.b16 %v2450
    %v2483 = vunpack.c.l.b16 %v2451
    %v2484 = vunpack.c.l.b16 %v2452
    %v2485 = vunpack.c.l.b16 %v2453
    %v2486 = vunpack.c.l.b16 %v2454
    %v2487 = vunpack.c.l.b16 %v2455
    %v2488 = vunpack.c.l.b16 %v2456
    %v2489 = vunpack.c.l.b16 %v2457
    %v2490 = vunpack.c.l.b16 %v2458
    %v2491 = vunpack.c.l.b16 %v2459
    %v2492 = vunpack.c.l.b16 %v2460
    %v2493 = vunpack.c.l.b16 %v2461
    %v2494 = vunpack.c.l.b16 %v2462
    %v2495 = vpack.c.b16 %v2480, %v2479
    %v2496 = vpack.c.b16 %v2482, %v2481
    %v2497 = vpack.c.b16 %v2484, %v2483
    %v2498 = vpack.c.b16 %v2486, %v2485
    %v2499 = vpack.c.b16 %v2488, %v2487
    %v2500 = vpack.c.b16 %v2490, %v2489
    %v2501 = vpack.c.b16 %v2492, %v2491
    %v2502 = vpack.c.b16 %v2494, %v2493
    %2511 = vmatprep.subr.bf16.mxu0 0
    %2512 = vmatpush1.bf16.msra.mxu0 %v2495
    %2513 = vmatprep.subr.bf16.mxu0 0
    %2514 = vmatpush1.bf16.msra.mxu0 %v2496
    %2515 = vmatprep.subr.bf16.mxu0 0
    %2516 = vmatpush1.bf16.msra.mxu0 %v2497
    %2517 = vmatprep.subr.bf16.mxu0 0
    %2518 = vmatpush1.bf16.msra.mxu0 %v2498
    %2519 = vmatprep.subr.bf16.mxu0 0
    %2520 = vmatpush1.bf16.msra.mxu0 %v2499
    %2521 = vmatprep.subr.bf16.mxu0 0
    %2522 = vmatpush1.bf16.msra.mxu0 %v2500
    %2523 = vmatprep.subr.bf16.mxu0 0
    %2524 = vmatpush1.bf16.msra.mxu0 %v2501
    %2525 = vmatprep.subr.bf16.mxu0 0
    %2526 = vmatpush1.bf16.msra.mxu0 %v2502
    %2527 = vmatprep.subr.bf16.mxu0 0
    %2528 = vmatpush1.bf16.msra.mxu0 0
    %2529 = vmatprep.subr.bf16.mxu0 0
    %2530 = vmatpush1.bf16.msra.mxu0 0
    %2531 = vmatprep.subr.bf16.mxu0 0
    %2532 = vmatpush1.bf16.msra.mxu0 0
    %2533 = vmatprep.subr.bf16.mxu0 0
    %2534 = vmatpush1.bf16.msra.mxu0 0
    %2535 = vmatprep.subr.bf16.mxu0 0
    %2536 = vmatpush1.bf16.msra.mxu0 0
    %2537 = vmatprep.subr.bf16.mxu0 0
    %2538 = vmatpush1.bf16.msra.mxu0 0
    %2539 = vmatprep.subr.bf16.mxu0 0
    %2540 = vmatpush1.bf16.msra.mxu0 0
    %2541 = vmatprep.subr.bf16.mxu0 0
    %2542 = vmatpush1.bf16.msra.mxu0 0
    %2543 = vmatprep.mubr.bf16.mxu0 0
    %2544 = vmatmul.mubr.bf16.gmra.mrb[0].mxu0 %v2446
    %v2545 = vpop.f32.mrb[0].mxu0
    %v2546 = vadd.f32 0.0, %v2545
    %v2547 = vpop.f32.mrb[0].mxu0
    %v2548 = vpop.f32.mrb[0].mxu0
    %v2549 = vpop.f32.mrb[0].mxu0
    %2550 = vdwg.mxu0
    %v2551 = vmax.f32 %v2546, 0.0
    %v2552 = vpack.c.bf16 %v2551, %v2551
    %v2553 = vld [vmem:[#allocation11] sm:$0xf]
    %v2554 = vld [vmem:[#allocation11 + $0x4] sm:$0xf]
    %v2555 = vld [vmem:[#allocation11 + $0x8] sm:$0xf]
    %v2556 = vld [vmem:[#allocation11 + $0xc] sm:$0xf]
    %v2557 = vld [vmem:[#allocation11 + $0x10] sm:$0xf]
    %v2558 = vld [vmem:[#allocation11 + $0x14] sm:$0xf]
    %v2559 = vld [vmem:[#allocation11 + $0x18] sm:$0xf]
    %v2560 = vld [vmem:[#allocation11 + $0x1c] sm:$0xf]
    %v2561 = vld [vmem:[#allocation11 + $0x20] sm:$0xf]
    %v2562 = vld [vmem:[#allocation11 + $0x24] sm:$0xf]
    %v2563 = vld [vmem:[#allocation11 + $0x28] sm:$0xf]
    %v2564 = vld [vmem:[#allocation11 + $0x2c] sm:$0xf]
    %v2565 = vld [vmem:[#allocation11 + $0x30] sm:$0xf]
    %v2566 = vld [vmem:[#allocation11 + $0x34] sm:$0xf]
    %v2567 = vld [vmem:[#allocation11 + $0x38] sm:$0xf]
    %v2568 = vld [vmem:[#allocation11 + $0x3c] sm:$0xf]
    %v2585 = vunpack.c.l.b16 %v2553
    %v2586 = vunpack.c.l.b16 %v2554
    %v2587 = vunpack.c.l.b16 %v2555
    %v2588 = vunpack.c.l.b16 %v2556
    %v2589 = vunpack.c.l.b16 %v2557
    %v2590 = vunpack.c.l.b16 %v2558
    %v2591 = vunpack.c.l.b16 %v2559
    %v2592 = vunpack.c.l.b16 %v2560
    %v2593 = vunpack.c.l.b16 %v2561
    %v2594 = vunpack.c.l.b16 %v2562
    %v2595 = vunpack.c.l.b16 %v2563
    %v2596 = vunpack.c.l.b16 %v2564
    %v2597 = vunpack.c.l.b16 %v2565
    %v2598 = vunpack.c.l.b16 %v2566
    %v2599 = vunpack.c.l.b16 %v2567
    %v2600 = vunpack.c.l.b16 %v2568
    %v2601 = vpack.c.b16 %v2586, %v2585
    %v2602 = vpack.c.b16 %v2588, %v2587
    %v2603 = vpack.c.b16 %v2590, %v2589
    %v2604 = vpack.c.b16 %v2592, %v2591
    %v2605 = vpack.c.b16 %v2594, %v2593
    %v2606 = vpack.c.b16 %v2596, %v2595
    %v2607 = vpack.c.b16 %v2598, %v2597
    %v2608 = vpack.c.b16 %v2600, %v2599
    %2617 = vmatprep.subr.bf16.mxu0 0
    %2618 = vmatpush1.bf16.msra.mxu0 %v2601
    %2619 = vmatprep.subr.bf16.mxu0 0
    %2620 = vmatpush1.bf16.msra.mxu0 %v2602
    %2621 = vmatprep.subr.bf16.mxu0 0
    %2622 = vmatpush1.bf16.msra.mxu0 %v2603
    %2623 = vmatprep.subr.bf16.mxu0 0
    %2624 = vmatpush1.bf16.msra.mxu0 %v2604
    %2625 = vmatprep.subr.bf16.mxu0 0
    %2626 = vmatpush1.bf16.msra.mxu0 %v2605
    %2627 = vmatprep.subr.bf16.mxu0 0
    %2628 = vmatpush1.bf16.msra.mxu0 %v2606
    %2629 = vmatprep.subr.bf16.mxu0 0
    %2630 = vmatpush1.bf16.msra.mxu0 %v2607
    %2631 = vmatprep.subr.bf16.mxu0 0
    %2632 = vmatpush1.bf16.msra.mxu0 %v2608
    %2633 = vmatprep.subr.bf16.mxu0 0
    %2634 = vmatpush1.bf16.msra.mxu0 0
    %2635 = vmatprep.subr.bf16.mxu0 0
    %2636 = vmatpush1.bf16.msra.mxu0 0
    %2637 = vmatprep.subr.bf16.mxu0 0
    %2638 = vmatpush1.bf16.msra.mxu0 0
    %2639 = vmatprep.subr.bf16.mxu0 0
    %2640 = vmatpush1.bf16.msra.mxu0 0
    %2641 = vmatprep.subr.bf16.mxu0 0
    %2642 = vmatpush1.bf16.msra.mxu0 0
    %2643 = vmatprep.subr.bf16.mxu0 0
    %2644 = vmatpush1.bf16.msra.mxu0 0
    %2645 = vmatprep.subr.bf16.mxu0 0
    %2646 = vmatpush1.bf16.msra.mxu0 0
    %2647 = vmatprep.subr.bf16.mxu0 0
    %2648 = vmatpush1.bf16.msra.mxu0 0
    %2649 = vmatprep.mubr.bf16.mxu0 0
    %2650 = vmatmul.mubr.bf16.gmra.mrb[0].mxu0 %v2552
    %v2651 = vpop.f32.mrb[0].mxu0
    %v2652 = vadd.f32 0.0, %v2651
    %v2653 = vpop.f32.mrb[0].mxu0
    %v2654 = vpop.f32.mrb[0].mxu0
    %v2655 = vpop.f32.mrb[0].mxu0
    %2656 = vdwg.mxu0
    %v2657 = vmax.f32 %v2652, 0.0
    %v2658 = vpack.c.bf16 %v2657, %v2657
    %v2659 = vld [vmem:[#allocation13] sm:$0xf]
    %v2660 = vld [vmem:[#allocation13 + $0x4] sm:$0xf]
    %v2661 = vld [vmem:[#allocation13 + $0x8] sm:$0xf]
    %v2662 = vld [vmem:[#allocation13 + $0xc] sm:$0xf]
    %v2663 = vld [vmem:[#allocation13 + $0x10] sm:$0xf]
    %v2664 = vld [vmem:[#allocation13 + $0x14] sm:$0xf]
    %v2665 = vld [vmem:[#allocation13 + $0x18] sm:$0xf]
    %v2666 = vld [vmem:[#allocation13 + $0x1c] sm:$0xf]
    %v2667 = vld [vmem:[#allocation13 + $0x20] sm:$0xf]
    %v2668 = vld [vmem:[#allocation13 + $0x24] sm:$0xf]
    %v2669 = vld [vmem:[#allocation13 + $0x28] sm:$0xf]
    %v2670 = vld [vmem:[#allocation13 + $0x2c] sm:$0xf]
    %v2671 = vld [vmem:[#allocation13 + $0x30] sm:$0xf]
    %v2672 = vld [vmem:[#allocation13 + $0x34] sm:$0xf]
    %v2673 = vld [vmem:[#allocation13 + $0x38] sm:$0xf]
    %v2674 = vld [vmem:[#allocation13 + $0x3c] sm:$0xf]
    %v2691 = vunpack.c.l.b16 %v2659
    %v2692 = vunpack.c.l.b16 %v2660
    %v2693 = vunpack.c.l.b16 %v2661
    %v2694 = vunpack.c.l.b16 %v2662
    %v2695 = vunpack.c.l.b16 %v2663
    %v2696 = vunpack.c.l.b16 %v2664
    %v2697 = vunpack.c.l.b16 %v2665
    %v2698 = vunpack.c.l.b16 %v2666
    %v2699 = vunpack.c.l.b16 %v2667
    %v2700 = vunpack.c.l.b16 %v2668
    %v2701 = vunpack.c.l.b16 %v2669
    %v2702 = vunpack.c.l.b16 %v2670
    %v2703 = vunpack.c.l.b16 %v2671
    %v2704 = vunpack.c.l.b16 %v2672
    %v2705 = vunpack.c.l.b16 %v2673
    %v2706 = vunpack.c.l.b16 %v2674
    %v2707 = vpack.c.b16 %v2692, %v2691
    %v2708 = vpack.c.b16 %v2694, %v2693
    %v2709 = vpack.c.b16 %v2696, %v2695
    %v2710 = vpack.c.b16 %v2698, %v2697
    %v2711 = vpack.c.b16 %v2700, %v2699
    %v2712 = vpack.c.b16 %v2702, %v2701
    %v2713 = vpack.c.b16 %v2704, %v2703
    %v2714 = vpack.c.b16 %v2706, %v2705
    %2723 = vmatprep.subr.bf16.mxu0 0
    %2724 = vmatpush1.bf16.msra.mxu0 %v2707
    %2725 = vmatprep.subr.bf16.mxu0 0
    %2726 = vmatpush1.bf16.msra.mxu0 %v2708
    %2727 = vmatprep.subr.bf16.mxu0 0
    %2728 = vmatpush1.bf16.msra.mxu0 %v2709
    %2729 = vmatprep.subr.bf16.mxu0 0
    %2730 = vmatpush1.bf16.msra.mxu0 %v2710
    %2731 = vmatprep.subr.bf16.mxu0 0
    %2732 = vmatpush1.bf16.msra.mxu0 %v2711
    %2733 = vmatprep.subr.bf16.mxu0 0
    %2734 = vmatpush1.bf16.msra.mxu0 %v2712
    %2735 = vmatprep.subr.bf16.mxu0 0
    %2736 = vmatpush1.bf16.msra.mxu0 %v2713
    %2737 = vmatprep.subr.bf16.mxu0 0
    %2738 = vmatpush1.bf16.msra.mxu0 %v2714
    %2739 = vmatprep.subr.bf16.mxu0 0
    %2740 = vmatpush1.bf16.msra.mxu0 0
    %2741 = vmatprep.subr.bf16.mxu0 0
    %2742 = vmatpush1.bf16.msra.mxu0 0
    %2743 = vmatprep.subr.bf16.mxu0 0
    %2744 = vmatpush1.bf16.msra.mxu0 0
    %2745 = vmatprep.subr.bf16.mxu0 0
    %2746 = vmatpush1.bf16.msra.mxu0 0
    %2747 = vmatprep.subr.bf16.mxu0 0
    %2748 = vmatpush1.bf16.msra.mxu0 0
    %2749 = vmatprep.subr.bf16.mxu0 0
    %2750 = vmatpush1.bf16.msra.mxu0 0
    %2751 = vmatprep.subr.bf16.mxu0 0
    %2752 = vmatpush1.bf16.msra.mxu0 0
    %2753 = vmatprep.subr.bf16.mxu0 0
    %2754 = vmatpush1.bf16.msra.mxu0 0
    %2755 = vmatprep.mubr.bf16.mxu0 0
    %2756 = vmatmul.mubr.bf16.gmra.mrb[0].mxu0 %v2658
    %v2757 = vpop.f32.mrb[0].mxu0
    %v2758 = vadd.f32 0.0, %v2757
    %v2759 = vpop.f32.mrb[0].mxu0
    %v2760 = vpop.f32.mrb[0].mxu0
    %v2761 = vpop.f32.mrb[0].mxu0
    %2762 = vdwg.mxu0
    %2763 = vst [vmem:[#allocation14] sm:$0xff] %v2758
    // Predicated region
    $region58: #{tpu_custom_call.1} parent=1 // pred_check
      _
    $region59: #{tpu_custom_call.1} parent=1 // pred_check_branch
      %2765 = sbr.rel (0) target = $region61
    $region60: #{tpu_custom_call.1} parent=1 // pred_region
      %s2767 = ssub.s32 128, 128
      %2768 = vsyncadd [#allocation4], %s2767
      %s2770 = sshll.u32 [#allocation14], 4
      %s2771 = int_to_ptr.vmem [resolvable:$true] %s2770
      %2773 = dma.vmem_to_hbm [thread:$0]  %s2771, 128, %s7, [#allocation4]
    $region61: #{tpu_custom_call.1} parent=1 // pred_fallthru
      _
    // Predicated region
    $region62: #{tpu_custom_call.1} parent=1 // pred_check
      _
    $region63: #{tpu_custom_call.1} parent=1 // pred_check_branch
      %2775 = sbr.rel (0) target = $region65
    $region64: #{tpu_custom_call.1} parent=1 // pred_region
      %2776 = dma.done [#allocation4], 128
    $region65: #{tpu_custom_call.1} parent=1 // pred_fallthru
      _
    %2777 = vsyncpa [#allocation3], 1
    %2778 = vsyncpa [#allocation6], 1
    %2779 = vsyncpa [#allocation9], 1
    %2780 = vsyncpa [#allocation12], 1
    %2781 = vsyncpa [#allocation4], 1

</llo_original>
